<compile_context>
chip_gen: v7x
topology: tpu7x:2x2x1
jax: 0.10.0
libtpu: 0.0.40
codegen_flags: <defaults>
</compile_context>

<pallas_src>
import jax
import jax.numpy as jnp
from jax.experimental import pallas as pl
from jax.experimental.pallas import tpu as pltpu

VMEM_LIMIT = 32 * 1024 * 1024  # fits default/physical budgets on v5e/v6e/v7x


def _round_up(x, m):
    return (x + m - 1) // m * m


def _row_tile(M):
    for t in (512, 256, 128, 64, 32, 16, 8):
        if M % t == 0:
            return t
    return M


def _pick_chunk(L, N, F, G, Hp, budget=8 << 20):
    """Largest Lc (<=16, divides L) whose per-chunk VMEM footprint fits budget."""
    for c in (16, 8, 4, 2, 1):
        if L % c:
            continue
        approx = 4 * c * N * (2 * F + G + 2 * Hp)  # x(x2) + gi scratch + out(x2)
        if approx <= budget:
            return c
    return 1


# -------------------- fused (input GEMM + recurrence) layers -----------------
def gru_layer_kernel(x_ref, wgi_ref, bgi_ref, whh_ref, brec_ref,
                     out_ref, h_scr, gi_scr):
    """One GRU layer over a chunk of Lc recurrence steps.

    x_ref:    (Lc, N, F)   layer input chunk (embeddings or previous layer h)
    wgi_ref:  (F, 3*Hp)    fused input weights [r|z|n]
    bgi_ref:  (1, 3*Hp)    folded biases [bir+bhr | biz+bhz | bin]   (f32)
    whh_ref:  (Hp, 3*Hp)   fused recurrent weights [r|z|n]
    brec_ref: (1, 3*Hp)    zeros except the n slice = bhn (scaled by r) (f32)
    out_ref:  (Lc, N, Hp)
    h_scr:    (N, Hp) f32  hidden state carried across grid steps
    gi_scr:   (Lc, N, 3*Hp) f32 per-chunk precomputed input projections
    """
    @pl.when(pl.program_id(0) == 0)
    def _init():
        h_scr[...] = jnp.zeros_like(h_scr)

    Lc, N, F = x_ref.shape
    Hp = h_scr.shape[-1]
    G = gi_scr.shape[-1]

    # Hoisted input projection for the whole chunk: one dense MXU GEMM.
    x2d = x_ref[...].astype(wgi_ref.dtype).reshape(Lc * N, F)
    gi_scr[...] = (jnp.dot(x2d, wgi_ref[...], preferred_element_type=jnp.float32)
                   + bgi_ref[...]).reshape(Lc, N, G)

    def step(l, carry):
        h = h_scr[...]
        gh = jnp.dot(h.astype(whh_ref.dtype), whh_ref[...],
                     preferred_element_type=jnp.float32) + brec_ref[...]
        gi = gi_scr[l]
        r = jax.nn.sigmoid(gi[:, 0:Hp] + gh[:, 0:Hp])
        z = jax.nn.sigmoid(gi[:, Hp:2 * Hp] + gh[:, Hp:2 * Hp])
        n = jnp.tanh(gi[:, 2 * Hp:3 * Hp] + r * gh[:, 2 * Hp:3 * Hp])
        h_new = (1.0 - z) * n + z * h
        h_scr[...] = h_new
        out_ref[l] = h_new
        return carry

    jax.lax.fori_loop(0, Lc, step, 0, unroll=True)


def rnn_layer_kernel(x_ref, wgi_ref, bgi_ref, whh_ref, out_ref, h_scr, gi_scr):
    """One tanh-RNN layer over a chunk of Lc recurrence steps (biases folded)."""
    @pl.when(pl.program_id(0) == 0)
    def _init():
        h_scr[...] = jnp.zeros_like(h_scr)

    Lc, N, F = x_ref.shape
    G = gi_scr.shape[-1]

    x2d = x_ref[...].astype(wgi_ref.dtype).reshape(Lc * N, F)
    gi_scr[...] = (jnp.dot(x2d, wgi_ref[...], preferred_element_type=jnp.float32)
                   + bgi_ref[...]).reshape(Lc, N, G)

    def step(l, carry):
        h = h_scr[...]
        pre = gi_scr[l] + jnp.dot(h.astype(whh_ref.dtype), whh_ref[...],
                                  preferred_element_type=jnp.float32)
        h_new = jnp.tanh(pre)
        h_scr[...] = h_new
        out_ref[l] = h_new
        return carry

    jax.lax.fori_loop(0, Lc, step, 0, unroll=True)


def _fused_layer(cell, x, lp, Hp):
    """x: [L, N, F] -> f32 [L, N, Hp]; recurrence over axis 0 in chunks of Lc."""
    L, N, F = x.shape
    G = lp["w_gi"].shape[1]
    Lc = _pick_chunk(L, N, F, G, Hp)

    in_specs = [
        pl.BlockSpec((Lc, N, F), lambda c: (c, 0, 0)),
        pl.BlockSpec(lp["w_gi"].shape, lambda c: (0, 0)),
        pl.BlockSpec(lp["b_gi"].shape, lambda c: (0, 0)),
        pl.BlockSpec(lp["whh"].shape, lambda c: (0, 0)),
    ]
    args = [x, lp["w_gi"], lp["b_gi"], lp["whh"]]
    if cell == "gru":
        in_specs.append(pl.BlockSpec(lp["b_rec"].shape, lambda c: (0, 0)))
        args.append(lp["b_rec"])
        kernel = gru_layer_kernel
    else:
        kernel = rnn_layer_kernel

    return pl.pallas_call(
        kernel,
        out_shape=jax.ShapeDtypeStruct((L, N, Hp), jnp.float32),
        grid=(L // Lc,),
        in_specs=in_specs,
        out_specs=pl.BlockSpec((Lc, N, Hp), lambda c: (c, 0, 0)),
        scratch_shapes=[pltpu.VMEM((N, Hp), jnp.float32),
                        pltpu.VMEM((Lc, N, G), jnp.float32)],
        compiler_params=pltpu.CompilerParams(
            dimension_semantics=("arbitrary",), vmem_limit_bytes=VMEM_LIMIT),
    )(*args)


# ------------------------- output layer + log_softmax ------------------------
def output_logsoftmax_kernel(h_ref, w_ref, b_ref, o_ref):
    h = h_ref[...].astype(w_ref.dtype)
    logits = jnp.dot(h, w_ref[...], preferred_element_type=jnp.float32) + b_ref[...]
    m = jnp.max(logits, axis=-1, keepdims=True)
    lse = jnp.log(jnp.sum(jnp.exp(logits - m), axis=-1, keepdims=True)) + m
    o_ref[...] = logits - lse


def output_logsoftmax(h2d, w_out_t, b_out):
    M, Hp = h2d.shape
    Vp = w_out_t.shape[-1]
    tm = _row_tile(M)
    return pl.pallas_call(
        output_logsoftmax_kernel,
        out_shape=jax.ShapeDtypeStruct((M, Vp), jnp.float32),
        grid=(M // tm,),
        in_specs=[
            pl.BlockSpec((tm, Hp), lambda i: (i, 0)),
            pl.BlockSpec((Hp, Vp), lambda i: (0, 0)),
            pl.BlockSpec((1, Vp), lambda i: (0, 0)),
        ],
        out_specs=pl.BlockSpec((tm, Vp), lambda i: (i, 0)),
        compiler_params=pltpu.CompilerParams(
            dimension_semantics=("parallel",), vmem_limit_bytes=VMEM_LIMIT),
    )(h2d, w_out_t, b_out)


# --------------------------------- forward -----------------------------------
def old_lm_forward(x_ids, kp, cell):
    B, T = x_ids.shape
    Hp, V, Vp = kp["Hp"], kp["V"], kp["Vp"]
    Np = _round_up(T, 8)

    emb = kp["embedding"][x_ids]                      # [B, T, E] (glue: plain JAX gather)
    if Np != T:
        emb = jnp.pad(emb, ((0, 0), (0, Np - T), (0, 0)))
    # PyTorch: permute to [T,B,E] and feed a batch_first RNN with h0 = zeros ->
    # recurrence over B, batch over T.  In our [L=B, N=T, feat] layout that is
    # exactly `emb` with no transpose.
    h = emb
    for lp in kp["layers"]:
        h = _fused_layer(cell, h, lp, Hp)             # f32 [B, Np, Hp]

    logp = output_logsoftmax(h.reshape(B * Np, Hp), kp["w_out_t"], kp["b_out"])
    return logp.reshape(B, Np, Vp)[:, :T, :V]


# -------------------------- deterministic parameters -------------------------
def init_params(key, cell, vocab_size, embed_size, hidden_dim, num_layers):
    """PyTorch-layout parameters (gate order r, z, n for GRU)."""
    stdv = 1.0 / float(hidden_dim) ** 0.5
    keys = iter(jax.random.split(key, 3 + 4 * num_layers))
    params = {"hidden_dim": hidden_dim}
    params["embedding"] = jax.random.normal(next(keys), (vocab_size, embed_size), jnp.float32)
    layers = []
    for layer in range(num_layers):
        in_dim = embed_size if layer == 0 else hidden_dim
        if cell == "gru":
            wih = jax.random.uniform(next(keys), (3, in_dim, hidden_dim), jnp.float32, -stdv, stdv)
            whh = jax.random.uniform(next(keys), (3, hidden_dim, hidden_dim), jnp.float32, -stdv, stdv)
            bih = jax.random.uniform(next(keys), (3, 1, hidden_dim), jnp.float32, -stdv, stdv)
            bhh = jax.random.uniform(next(keys), (3, 1, hidden_dim), jnp.float32, -stdv, stdv)
        else:  # 'rnn'
            wih = jax.random.uniform(next(keys), (in_dim, hidden_dim), jnp.float32, -stdv, stdv)
            whh = jax.random.uniform(next(keys), (hidden_dim, hidden_dim), jnp.float32, -stdv, stdv)
            bih = jax.random.uniform(next(keys), (1, hidden_dim), jnp.float32, -stdv, stdv)
            bhh = jax.random.uniform(next(keys), (1, hidden_dim), jnp.float32, -stdv, stdv)
        layers.append(dict(wih=wih, whh=whh, bih=bih, bhh=bhh))
    params["layers"] = layers
    params["w_out_t"] = jax.random.uniform(next(keys), (hidden_dim, vocab_size), jnp.float32, -stdv, stdv)
    params["b_out"] = jax.random.uniform(next(keys), (1, vocab_size), jnp.float32, -stdv, stdv)
    return params


def prep_kernel_params(params, cell, compute_dtype=jnp.float32):
    """Fuse gates, fold biases and pad everything lane-dense for the kernels."""
    H = params["hidden_dim"]
    Hp = _round_up(H, 128)
    E = params["embedding"].shape[1]
    V = params["w_out_t"].shape[1]
    Vp = _round_up(V, 128)

    kp = {"H": H, "Hp": Hp, "V": V, "Vp": Vp,
          "embedding": params["embedding"].astype(compute_dtype)}

    layers = []
    for li, lp in enumerate(params["layers"]):
        in_dim = E if li == 0 else H
        in_dim_p = E if li == 0 else Hp            # layer>=1 input is the padded hidden
        if cell == "gru":
            G = 3 * Hp
            w_gi = jnp.zeros((in_dim_p, G), jnp.float32)
            whh = jnp.zeros((Hp, G), jnp.float32)
            b_gi = jnp.zeros((1, G), jnp.float32)
            b_rec = jnp.zeros((1, G), jnp.float32)
            for g in range(3):
                w_gi = w_gi.at[:in_dim, g * Hp:g * Hp + H].set(lp["wih"][g])
                whh = whh.at[:H, g * Hp:g * Hp + H].set(lp["whh"][g])
            # fold r/z biases fully into the hoisted GI; keep bhn for the recurrence
            b_gi = b_gi.at[:, 0 * Hp:0 * Hp + H].set(lp["bih"][0] + lp["bhh"][0])
            b_gi = b_gi.at[:, 1 * Hp:1 * Hp + H].set(lp["bih"][1] + lp["bhh"][1])
            b_gi = b_gi.at[:, 2 * Hp:2 * Hp + H].set(lp["bih"][2])
            b_rec = b_rec.at[:, 2 * Hp:2 * Hp + H].set(lp["bhh"][2])
        else:  # 'rnn'
            G = Hp
            w_gi = jnp.zeros((in_dim_p, G), jnp.float32).at[:in_dim, :H].set(lp["wih"])
            whh = jnp.zeros((Hp, G), jnp.float32).at[:H, :H].set(lp["whh"])
            b_gi = jnp.zeros((1, G), jnp.float32).at[:, :H].set(lp["bih"] + lp["bhh"])
            b_rec = None
        layers.append(dict(w_gi=w_gi.astype(compute_dtype),
                           whh=whh.astype(compute_dtype),
                           b_gi=b_gi, b_rec=b_rec))
    kp["layers"] = layers

    w_out = jnp.zeros((Hp, Vp), jnp.float32).at[:H, :V].set(params["w_out_t"])
    # padded vocab columns get a huge negative bias so they vanish in the softmax sum
    b_out = jnp.full((1, Vp), -1e30, jnp.float32).at[:, :V].set(params["b_out"])
    kp["w_out_t"] = w_out.astype(compute_dtype)
    kp["b_out"] = b_out
    return kp


# ------------------------------ pure-JAX reference ----------------------------
def _ref_forward(x_ids, params, cell):
    h = params["embedding"][x_ids].astype(jnp.float32)          # [B, T, E]
    H = params["hidden_dim"]
    for lp in params["layers"]:
        wih, whh, bih, bhh = lp["wih"], lp["whh"], lp["bih"], lp["bhh"]
        N = h.shape[1]

        def step(carry, x, wih=wih, whh=whh, bih=bih, bhh=bhh):
            if cell == "gru":
                gi = jnp.einsum("ne,geh->gnh", x, wih) + bih
                gh = jnp.einsum("nh,ghk->gnk", carry, whh) + bhh
                r = jax.nn.sigmoid(gi[0] + gh[0])
                z = jax.nn.sigmoid(gi[1] + gh[1])
                n = jnp.tanh(gi[2] + r * gh[2])
                new = (1.0 - z) * n + z * carry
            else:
                new = jnp.tanh(x @ wih + bih + carry @ whh + bhh)
            return new, new

        _, h = jax.lax.scan(step, jnp.zeros((N, H), jnp.float32), h)
    B, T, _ = h.shape
    logits = h.reshape(B * T, H) @ params["w_out_t"] + params["b_out"]
    return jax.nn.log_softmax(logits, axis=-1).reshape(B, T, -1)


# ------------------------------------ main ------------------------------------
if __name__ == "__main__":
    B, T = 2, 8
    vocab_size, embed_size, hidden_dim, num_layers = 32, 16, 32, 2

    key = jax.random.PRNGKey(0)
    kx, kparam = jax.random.split(key)
    x = jax.random.randint(kx, (B, T), 0, vocab_size, dtype=jnp.int32)

    ok = True
    for cell in ("gru", "rnn"):
        params = init_params(kparam, cell, vocab_size, embed_size, hidden_dim, num_layers)
        ref = _ref_forward(x, params, cell)

        # f32 matmul path: tight check against the pure-JAX reference.
        kp32 = prep_kernel_params(params, cell, jnp.float32)
        out32 = jax.block_until_ready(
            jax.jit(lambda xi, kp=kp32, c=cell: old_lm_forward(xi, kp, c))(x))
        if out32.shape != (B, T, vocab_size) or not jnp.allclose(out32, ref, atol=1e-4, rtol=1e-4):
            ok = False

        # bf16 matmul-operand path (native MXU dtype): loose check.
        kp16 = prep_kernel_params(params, cell, jnp.bfloat16)
        out16 = jax.block_until_ready(
            jax.jit(lambda xi, kp=kp16, c=cell: old_lm_forward(xi, kp, c))(x))
        if (out16.shape != (B, T, vocab_size)
                or not bool(jnp.all(jnp.isfinite(out16)))
                or not jnp.allclose(out16, ref, atol=0.25, rtol=0.1)):
            ok = False

    if ok:
        print("KERNEL_OK")
    else:
        print("MISMATCH")
</pallas_src>

<mosaic_0001>
module attributes {stable_mosaic.version = 11 : i64} {
  func.func @output_logsoftmax_kernel(%arg0: i32, %arg1: memref<16x128xf32, #tpu.memory_space<vmem>>, %arg2: memref<128x128xf32, #tpu.memory_space<vmem>>, %arg3: memref<1x128xf32, #tpu.memory_space<vmem>>, %arg4: memref<16x128xf32, #tpu.memory_space<vmem>>) attributes {dimension_semantics = [#tpu.dimension_semantics<parallel>], iteration_bounds = array<i64: 1>, scalar_prefetch = 0 : i64, scratch_operands = 0 : i64, tpu.core_type = #tpu.core_type<tc>, window_params = [{transform_indices = @transform_0, window_bounds = array<i64: 16, 128>}, {pipeline_mode = #tpu.pipeline_mode<synchronous>, transform_indices = @transform_1, window_bounds = array<i64: 128, 128>}, {pipeline_mode = #tpu.pipeline_mode<synchronous>, transform_indices = @transform_2, window_bounds = array<i64: 1, 128>}, {transform_indices = @transform_3, window_bounds = array<i64: 16, 128>}]} {
    %c0 = arith.constant 0 : index
    %c0_0 = arith.constant 0 : index
    %0 = vector.load %arg1[%c0, %c0_0] : memref<16x128xf32, #tpu.memory_space<vmem>>, vector<16x128xf32>
    %c0_1 = arith.constant 0 : index
    %c0_2 = arith.constant 0 : index
    %1 = vector.load %arg2[%c0_1, %c0_2] : memref<128x128xf32, #tpu.memory_space<vmem>>, vector<128x128xf32>
    %cst = arith.constant dense<0.000000e+00> : vector<16x128xf32>
    %2 = tpu.matmul %0, %1, %cst {dimension_numbers = #tpu.dot_dimension_numbers<[1], [0], [0], [1], [0, 0, 1, 1], [], []>} : vector<16x128xf32>, vector<128x128xf32>, vector<16x128xf32> -> vector<16x128xf32>
    %c0_3 = arith.constant 0 : index
    %c0_4 = arith.constant 0 : index
    %3 = vector.load %arg3[%c0_3, %c0_4] : memref<1x128xf32, #tpu.memory_space<vmem>>, vector<1x128xf32>
    %4 = vector.broadcast %3 : vector<1x128xf32> to vector<16x128xf32>
    %5 = arith.addf %2, %4 : vector<16x128xf32>
    %cst_5 = arith.constant dense<0xFF800000> : vector<16xf32>
    %6 = vector.multi_reduction <maximumf>, %5, %cst_5 [1] : vector<16x128xf32> to vector<16xf32>
    %7 = vector.shape_cast %6 : vector<16xf32> to vector<16x1xf32>
    %8 = vector.broadcast %7 : vector<16x1xf32> to vector<16x128xf32>
    %9 = arith.subf %5, %8 : vector<16x128xf32>
    %10 = math.exp %9 : vector<16x128xf32>
    %cst_6 = arith.constant dense<0.000000e+00> : vector<16xf32>
    %11 = vector.multi_reduction <add>, %10, %cst_6 [1] : vector<16x128xf32> to vector<16xf32>
    %12 = vector.shape_cast %11 : vector<16xf32> to vector<16x1xf32>
    %13 = math.log %12 : vector<16x1xf32>
    %14 = arith.addf %13, %7 : vector<16x1xf32>
    %15 = vector.broadcast %14 : vector<16x1xf32> to vector<16x128xf32>
    %16 = arith.subf %5, %15 : vector<16x128xf32>
    %c0_7 = arith.constant 0 : index
    %c0_8 = arith.constant 0 : index
    %17 = vector.load %arg4[%c0_7, %c0_8] : memref<16x128xf32, #tpu.memory_space<vmem>>, vector<16x128xf32>
    tpu.vector_store %arg4[%c0_7, %c0_8], %16 {strides = array<i32>} : memref<16x128xf32, #tpu.memory_space<vmem>>, vector<16x128xf32>,
    return
  }
  func.func @transform_0(%arg0: i32) -> (i32, i32) {
    %c0_i32 = arith.constant 0 : i32
    %c0_i32_0 = arith.constant 0 : i32
    return %arg0, %c0_i32 : i32, i32
  }
  func.func @transform_1(%arg0: i32) -> (i32, i32) {
    %c0_i32 = arith.constant 0 : i32
    %c0_i32_0 = arith.constant 0 : i32
    %c0_i32_1 = arith.constant 0 : i32
    return %c0_i32, %c0_i32_0 : i32, i32
  }
  func.func @transform_2(%arg0: i32) -> (i32, i32) {
    %c0_i32 = arith.constant 0 : i32
    %c0_i32_0 = arith.constant 0 : i32
    %c0_i32_1 = arith.constant 0 : i32
    return %c0_i32, %c0_i32_0 : i32, i32
  }
  func.func @transform_3(%arg0: i32) -> (i32, i32) {
    %c0_i32 = arith.constant 0 : i32
    %c0_i32_0 = arith.constant 0 : i32
    return %arg0, %c0_i32 : i32, i32
  }
}

module attributes {stable_mosaic.version = 11 : i64} {
  func.func @gru_layer_kernel(%arg0: i32, %arg1: memref<2x8x128xf32, #tpu.memory_space<vmem>>, %arg2: memref<128x384xf32, #tpu.memory_space<vmem>>, %arg3: memref<1x384xf32, #tpu.memory_space<vmem>>, %arg4: memref<128x384xf32, #tpu.memory_space<vmem>>, %arg5: memref<1x384xf32, #tpu.memory_space<vmem>>, %arg6: memref<2x8x128xf32, #tpu.memory_space<vmem>>, %arg7: memref<8x128xf32, #tpu.memory_space<vmem>>, %arg8: memref<2x8x384xf32, #tpu.memory_space<vmem>>) attributes {dimension_semantics = [#tpu.dimension_semantics<arbitrary>], iteration_bounds = array<i64: 1>, scalar_prefetch = 0 : i64, scratch_operands = 2 : i64, tpu.core_type = #tpu.core_type<tc>, window_params = [{transform_indices = @transform_0, window_bounds = array<i64: 2, 8, 128>}, {pipeline_mode = #tpu.pipeline_mode<synchronous>, transform_indices = @transform_1, window_bounds = array<i64: 128, 384>}, {pipeline_mode = #tpu.pipeline_mode<synchronous>, transform_indices = @transform_2, window_bounds = array<i64: 1, 384>}, {pipeline_mode = #tpu.pipeline_mode<synchronous>, transform_indices = @transform_3, window_bounds = array<i64: 128, 384>}, {pipeline_mode = #tpu.pipeline_mode<synchronous>, transform_indices = @transform_4, window_bounds = array<i64: 1, 384>}, {transform_indices = @transform_5, window_bounds = array<i64: 2, 8, 128>}]} {
    %c0_i32 = arith.constant 0 : i32
    %0 = arith.cmpi eq, %arg0, %c0_i32 : i32
    %1 = arith.extui %0 : i1 to i32
    %c0_i32_0 = arith.constant 0 : i32
    %2 = arith.cmpi ne, %1, %c0_i32_0 : i32
    scf.if %2 {
      %cst_43 = arith.constant 0.000000e+00 : f32
      %92 = vector.broadcast %cst_43 : f32 to vector<8x128xf32>
      %c0_44 = arith.constant 0 : index
      %c0_45 = arith.constant 0 : index
      %93 = vector.load %arg7[%c0_44, %c0_45] : memref<8x128xf32, #tpu.memory_space<vmem>>, vector<8x128xf32>
      tpu.vector_store %arg7[%c0_44, %c0_45], %92 {strides = array<i32>} : memref<8x128xf32, #tpu.memory_space<vmem>>, vector<8x128xf32>,
    } else {
    }
    %c0 = arith.constant 0 : index
    %c0_1 = arith.constant 0 : index
    %c0_2 = arith.constant 0 : index
    %3 = vector.load %arg1[%c0, %c0_1, %c0_2] : memref<2x8x128xf32, #tpu.memory_space<vmem>>, vector<2x8x128xf32>
    %4 = vector.shape_cast %3 : vector<2x8x128xf32> to vector<16x128xf32>
    %c0_3 = arith.constant 0 : index
    %c0_4 = arith.constant 0 : index
    %5 = vector.load %arg2[%c0_3, %c0_4] : memref<128x384xf32, #tpu.memory_space<vmem>>, vector<128x384xf32>
    %cst = arith.constant dense<0.000000e+00> : vector<16x384xf32>
    %6 = tpu.matmul %4, %5, %cst {dimension_numbers = #tpu.dot_dimension_numbers<[1], [0], [0], [1], [0, 0, 1, 1], [], []>} : vector<16x128xf32>, vector<128x384xf32>, vector<16x384xf32> -> vector<16x384xf32>
    %c0_5 = arith.constant 0 : index
    %c0_6 = arith.constant 0 : index
    %7 = vector.load %arg3[%c0_5, %c0_6] : memref<1x384xf32, #tpu.memory_space<vmem>>, vector<1x384xf32>
    %8 = vector.broadcast %7 : vector<1x384xf32> to vector<16x384xf32>
    %9 = arith.addf %6, %8 : vector<16x384xf32>
    %10 = vector.shape_cast %9 : vector<16x384xf32> to vector<2x8x384xf32>
    %c0_7 = arith.constant 0 : index
    %c0_8 = arith.constant 0 : index
    %c0_9 = arith.constant 0 : index
    %11 = vector.load %arg8[%c0_7, %c0_8, %c0_9] : memref<2x8x384xf32, #tpu.memory_space<vmem>>, vector<2x8x384xf32>
    tpu.vector_store %arg8[%c0_7, %c0_8, %c0_9], %10 {strides = array<i32>} : memref<2x8x384xf32, #tpu.memory_space<vmem>>, vector<2x8x384xf32>,
    %c0_i32_10 = arith.constant 0 : i32
    %c0_11 = arith.constant 0 : index
    %c0_12 = arith.constant 0 : index
    %12 = vector.load %arg7[%c0_11, %c0_12] : memref<8x128xf32, #tpu.memory_space<vmem>>, vector<8x128xf32>
    %c0_13 = arith.constant 0 : index
    %c0_14 = arith.constant 0 : index
    %13 = vector.load %arg4[%c0_13, %c0_14] : memref<128x384xf32, #tpu.memory_space<vmem>>, vector<128x384xf32>
    %cst_15 = arith.constant dense<0.000000e+00> : vector<8x384xf32>
    %14 = tpu.matmul %12, %13, %cst_15 {dimension_numbers = #tpu.dot_dimension_numbers<[1], [0], [0], [1], [0, 0, 1, 1], [], []>} : vector<8x128xf32>, vector<128x384xf32>, vector<8x384xf32> -> vector<8x384xf32>
    %c0_16 = arith.constant 0 : index
    %c0_17 = arith.constant 0 : index
    %15 = vector.load %arg5[%c0_16, %c0_17] : memref<1x384xf32, #tpu.memory_space<vmem>>, vector<1x384xf32>
    %16 = vector.broadcast %15 : vector<1x384xf32> to vector<8x384xf32>
    %17 = arith.addf %14, %16 : vector<8x384xf32>
    %18 = arith.index_cast %c0_i32_10 : i32 to index
    %c0_18 = arith.constant 0 : index
    %c0_19 = arith.constant 0 : index
    %19 = vector.load %arg8[%18, %c0_18, %c0_19] : memref<2x8x384xf32, #tpu.memory_space<vmem>>, vector<1x8x384xf32>
    %20 = vector.shape_cast %19 : vector<1x8x384xf32> to vector<8x384xf32>
    %21 = vector.extract_strided_slice %20 {offsets = [0, 0], sizes = [8, 128], strides = [1, 1]} : vector<8x384xf32> to vector<8x128xf32>
    %22 = vector.extract_strided_slice %17 {offsets = [0, 0], sizes = [8, 128], strides = [1, 1]} : vector<8x384xf32> to vector<8x128xf32>
    %23 = arith.addf %21, %22 : vector<8x128xf32>
    %24 = arith.negf %23 : vector<8x128xf32>
    %25 = math.exp %24 : vector<8x128xf32>
    %cst_20 = arith.constant 1.000000e+00 : f32
    %26 = vector.broadcast %cst_20 : f32 to vector<8x128xf32>
    %27 = arith.addf %26, %25 : vector<8x128xf32>
    %28 = arith.divf %26, %27 : vector<8x128xf32>
    %29 = vector.extract_strided_slice %20 {offsets = [0, 128], sizes = [8, 128], strides = [1, 1]} : vector<8x384xf32> to vector<8x128xf32>
    %30 = vector.extract_strided_slice %17 {offsets = [0, 128], sizes = [8, 128], strides = [1, 1]} : vector<8x384xf32> to vector<8x128xf32>
    %31 = arith.addf %29, %30 : vector<8x128xf32>
    %32 = arith.negf %31 : vector<8x128xf32>
    %33 = math.exp %32 : vector<8x128xf32>
    %cst_21 = arith.constant 1.000000e+00 : f32
    %34 = vector.broadcast %cst_21 : f32 to vector<8x128xf32>
    %35 = arith.addf %34, %33 : vector<8x128xf32>
    %36 = arith.divf %34, %35 : vector<8x128xf32>
    %37 = vector.extract_strided_slice %20 {offsets = [0, 256], sizes = [8, 128], strides = [1, 1]} : vector<8x384xf32> to vector<8x128xf32>
    %38 = vector.extract_strided_slice %17 {offsets = [0, 256], sizes = [8, 128], strides = [1, 1]} : vector<8x384xf32> to vector<8x128xf32>
    %39 = arith.mulf %28, %38 : vector<8x128xf32>
    %40 = arith.addf %37, %39 : vector<8x128xf32>
    %41 = math.tanh %40 : vector<8x128xf32>
    %cst_22 = arith.constant 1.000000e+00 : f32
    %42 = vector.broadcast %cst_22 : f32 to vector<8x128xf32>
    %43 = arith.subf %42, %36 : vector<8x128xf32>
    %44 = arith.mulf %43, %41 : vector<8x128xf32>
    %45 = arith.mulf %36, %12 : vector<8x128xf32>
    %46 = arith.addf %44, %45 : vector<8x128xf32>
    %c0_23 = arith.constant 0 : index
    %c0_24 = arith.constant 0 : index
    %47 = vector.load %arg7[%c0_23, %c0_24] : memref<8x128xf32, #tpu.memory_space<vmem>>, vector<8x128xf32>
    tpu.vector_store %arg7[%c0_23, %c0_24], %46 {strides = array<i32>} : memref<8x128xf32, #tpu.memory_space<vmem>>, vector<8x128xf32>,
    %48 = arith.index_cast %c0_i32_10 : i32 to index
    %c0_25 = arith.constant 0 : index
    %c0_26 = arith.constant 0 : index
    %49 = vector.load %arg6[%48, %c0_25, %c0_26] : memref<2x8x128xf32, #tpu.memory_space<vmem>>, vector<1x8x128xf32>
    %50 = vector.shape_cast %49 : vector<1x8x128xf32> to vector<8x128xf32>
    %51 = vector.shape_cast %46 : vector<8x128xf32> to vector<1x8x128xf32>
    tpu.vector_store %arg6[%48, %c0_25, %c0_26], %51 {strides = array<i32>} : memref<2x8x128xf32, #tpu.memory_space<vmem>>, vector<1x8x128xf32>,
    %c1_i32 = arith.constant 1 : i32
    %c0_27 = arith.constant 0 : index
    %c0_28 = arith.constant 0 : index
    %52 = vector.load %arg7[%c0_27, %c0_28] : memref<8x128xf32, #tpu.memory_space<vmem>>, vector<8x128xf32>
    %c0_29 = arith.constant 0 : index
    %c0_30 = arith.constant 0 : index
    %53 = vector.load %arg4[%c0_29, %c0_30] : memref<128x384xf32, #tpu.memory_space<vmem>>, vector<128x384xf32>
    %cst_31 = arith.constant dense<0.000000e+00> : vector<8x384xf32>
    %54 = tpu.matmul %52, %53, %cst_31 {dimension_numbers = #tpu.dot_dimension_numbers<[1], [0], [0], [1], [0, 0, 1, 1], [], []>} : vector<8x128xf32>, vector<128x384xf32>, vector<8x384xf32> -> vector<8x384xf32>
    %c0_32 = arith.constant 0 : index
    %c0_33 = arith.constant 0 : index
    %55 = vector.load %arg5[%c0_32, %c0_33] : memref<1x384xf32, #tpu.memory_space<vmem>>, vector<1x384xf32>
    %56 = vector.broadcast %55 : vector<1x384xf32> to vector<8x384xf32>
    %57 = arith.addf %54, %56 : vector<8x384xf32>
    %58 = arith.index_cast %c1_i32 : i32 to index
    %c0_34 = arith.constant 0 : index
    %c0_35 = arith.constant 0 : index
    %59 = vector.load %arg8[%58, %c0_34, %c0_35] : memref<2x8x384xf32, #tpu.memory_space<vmem>>, vector<1x8x384xf32>
    %60 = vector.shape_cast %59 : vector<1x8x384xf32> to vector<8x384xf32>
    %61 = vector.extract_strided_slice %60 {offsets = [0, 0], sizes = [8, 128], strides = [1, 1]} : vector<8x384xf32> to vector<8x128xf32>
    %62 = vector.extract_strided_slice %57 {offsets = [0, 0], sizes = [8, 128], strides = [1, 1]} : vector<8x384xf32> to vector<8x128xf32>
    %63 = arith.addf %61, %62 : vector<8x128xf32>
    %64 = arith.negf %63 : vector<8x128xf32>
    %65 = math.exp %64 : vector<8x128xf32>
    %cst_36 = arith.constant 1.000000e+00 : f32
    %66 = vector.broadcast %cst_36 : f32 to vector<8x128xf32>
    %67 = arith.addf %66, %65 : vector<8x128xf32>
    %68 = arith.divf %66, %67 : vector<8x128xf32>
    %69 = vector.extract_strided_slice %60 {offsets = [0, 128], sizes = [8, 128], strides = [1, 1]} : vector<8x384xf32> to vector<8x128xf32>
    %70 = vector.extract_strided_slice %57 {offsets = [0, 128], sizes = [8, 128], strides = [1, 1]} : vector<8x384xf32> to vector<8x128xf32>
    %71 = arith.addf %69, %70 : vector<8x128xf32>
    %72 = arith.negf %71 : vector<8x128xf32>
    %73 = math.exp %72 : vector<8x128xf32>
    %cst_37 = arith.constant 1.000000e+00 : f32
    %74 = vector.broadcast %cst_37 : f32 to vector<8x128xf32>
    %75 = arith.addf %74, %73 : vector<8x128xf32>
    %76 = arith.divf %74, %75 : vector<8x128xf32>
    %77 = vector.extract_strided_slice %60 {offsets = [0, 256], sizes = [8, 128], strides = [1, 1]} : vector<8x384xf32> to vector<8x128xf32>
    %78 = vector.extract_strided_slice %57 {offsets = [0, 256], sizes = [8, 128], strides = [1, 1]} : vector<8x384xf32> to vector<8x128xf32>
    %79 = arith.mulf %68, %78 : vector<8x128xf32>
    %80 = arith.addf %77, %79 : vector<8x128xf32>
    %81 = math.tanh %80 : vector<8x128xf32>
    %cst_38 = arith.constant 1.000000e+00 : f32
    %82 = vector.broadcast %cst_38 : f32 to vector<8x128xf32>
    %83 = arith.subf %82, %76 : vector<8x128xf32>
    %84 = arith.mulf %83, %81 : vector<8x128xf32>
    %85 = arith.mulf %76, %52 : vector<8x128xf32>
    %86 = arith.addf %84, %85 : vector<8x128xf32>
    %c0_39 = arith.constant 0 : index
    %c0_40 = arith.constant 0 : index
    %87 = vector.load %arg7[%c0_39, %c0_40] : memref<8x128xf32, #tpu.memory_space<vmem>>, vector<8x128xf32>
    tpu.vector_store %arg7[%c0_39, %c0_40], %86 {strides = array<i32>} : memref<8x128xf32, #tpu.memory_space<vmem>>, vector<8x128xf32>,
    %88 = arith.index_cast %c1_i32 : i32 to index
    %c0_41 = arith.constant 0 : index
    %c0_42 = arith.constant 0 : index
    %89 = vector.load %arg6[%88, %c0_41, %c0_42] : memref<2x8x128xf32, #tpu.memory_space<vmem>>, vector<1x8x128xf32>
    %90 = vector.shape_cast %89 : vector<1x8x128xf32> to vector<8x128xf32>
    %91 = vector.shape_cast %86 : vector<8x128xf32> to vector<1x8x128xf32>
    tpu.vector_store %arg6[%88, %c0_41, %c0_42], %91 {strides = array<i32>} : memref<2x8x128xf32, #tpu.memory_space<vmem>>, vector<1x8x128xf32>,
    %c2_i32 = arith.constant 2 : i32
    return
  }
  func.func @transform_0(%arg0: i32) -> (i32, i32, i32) {
    %c0_i32 = arith.constant 0 : i32
    %c0_i32_0 = arith.constant 0 : i32
    %c0_i32_1 = arith.constant 0 : i32
    return %arg0, %c0_i32, %c0_i32_0 : i32, i32, i32
  }
  func.func @transform_1(%arg0: i32) -> (i32, i32) {
    %c0_i32 = arith.constant 0 : i32
    %c0_i32_0 = arith.constant 0 : i32
    %c0_i32_1 = arith.constant 0 : i32
    return %c0_i32, %c0_i32_0 : i32, i32
  }
  func.func @transform_2(%arg0: i32) -> (i32, i32) {
    %c0_i32 = arith.constant 0 : i32
    %c0_i32_0 = arith.constant 0 : i32
    %c0_i32_1 = arith.constant 0 : i32
    return %c0_i32, %c0_i32_0 : i32, i32
  }
  func.func @transform_3(%arg0: i32) -> (i32, i32) {
    %c0_i32 = arith.constant 0 : i32
    %c0_i32_0 = arith.constant 0 : i32
    %c0_i32_1 = arith.constant 0 : i32
    return %c0_i32, %c0_i32_0 : i32, i32
  }
  func.func @transform_4(%arg0: i32) -> (i32, i32) {
    %c0_i32 = arith.constant 0 : i32
    %c0_i32_0 = arith.constant 0 : i32
    %c0_i32_1 = arith.constant 0 : i32
    return %c0_i32, %c0_i32_0 : i32, i32
  }
  func.func @transform_5(%arg0: i32) -> (i32, i32, i32) {
    %c0_i32 = arith.constant 0 : i32
    %c0_i32_0 = arith.constant 0 : i32
    %c0_i32_1 = arith.constant 0 : i32
    return %arg0, %c0_i32, %c0_i32_0 : i32, i32, i32
  }
}

module attributes {stable_mosaic.version = 11 : i64} {
  func.func @gru_layer_kernel(%arg0: i32, %arg1: memref<2x8x16xf32, #tpu.memory_space<vmem>>, %arg2: memref<16x384xf32, #tpu.memory_space<vmem>>, %arg3: memref<1x384xf32, #tpu.memory_space<vmem>>, %arg4: memref<128x384xf32, #tpu.memory_space<vmem>>, %arg5: memref<1x384xf32, #tpu.memory_space<vmem>>, %arg6: memref<2x8x128xf32, #tpu.memory_space<vmem>>, %arg7: memref<8x128xf32, #tpu.memory_space<vmem>>, %arg8: memref<2x8x384xf32, #tpu.memory_space<vmem>>) attributes {dimension_semantics = [#tpu.dimension_semantics<arbitrary>], iteration_bounds = array<i64: 1>, scalar_prefetch = 0 : i64, scratch_operands = 2 : i64, tpu.core_type = #tpu.core_type<tc>, window_params = [{transform_indices = @transform_0, window_bounds = array<i64: 2, 8, 16>}, {pipeline_mode = #tpu.pipeline_mode<synchronous>, transform_indices = @transform_1, window_bounds = array<i64: 16, 384>}, {pipeline_mode = #tpu.pipeline_mode<synchronous>, transform_indices = @transform_2, window_bounds = array<i64: 1, 384>}, {pipeline_mode = #tpu.pipeline_mode<synchronous>, transform_indices = @transform_3, window_bounds = array<i64: 128, 384>}, {pipeline_mode = #tpu.pipeline_mode<synchronous>, transform_indices = @transform_4, window_bounds = array<i64: 1, 384>}, {transform_indices = @transform_5, window_bounds = array<i64: 2, 8, 128>}]} {
    %c0_i32 = arith.constant 0 : i32
    %0 = arith.cmpi eq, %arg0, %c0_i32 : i32
    %1 = arith.extui %0 : i1 to i32
    %c0_i32_0 = arith.constant 0 : i32
    %2 = arith.cmpi ne, %1, %c0_i32_0 : i32
    scf.if %2 {
      %cst_43 = arith.constant 0.000000e+00 : f32
      %92 = vector.broadcast %cst_43 : f32 to vector<8x128xf32>
      %c0_44 = arith.constant 0 : index
      %c0_45 = arith.constant 0 : index
      %93 = vector.load %arg7[%c0_44, %c0_45] : memref<8x128xf32, #tpu.memory_space<vmem>>, vector<8x128xf32>
      tpu.vector_store %arg7[%c0_44, %c0_45], %92 {strides = array<i32>} : memref<8x128xf32, #tpu.memory_space<vmem>>, vector<8x128xf32>,
    } else {
    }
    %c0 = arith.constant 0 : index
    %c0_1 = arith.constant 0 : index
    %c0_2 = arith.constant 0 : index
    %3 = vector.load %arg1[%c0, %c0_1, %c0_2] : memref<2x8x16xf32, #tpu.memory_space<vmem>>, vector<2x8x16xf32>
    %4 = vector.shape_cast %3 : vector<2x8x16xf32> to vector<16x16xf32>
    %c0_3 = arith.constant 0 : index
    %c0_4 = arith.constant 0 : index
    %5 = vector.load %arg2[%c0_3, %c0_4] : memref<16x384xf32, #tpu.memory_space<vmem>>, vector<16x384xf32>
    %cst = arith.constant dense<0.000000e+00> : vector<16x384xf32>
    %6 = tpu.matmul %4, %5, %cst {dimension_numbers = #tpu.dot_dimension_numbers<[1], [0], [0], [1], [0, 0, 1, 1], [], []>} : vector<16x16xf32>, vector<16x384xf32>, vector<16x384xf32> -> vector<16x384xf32>
    %c0_5 = arith.constant 0 : index
    %c0_6 = arith.constant 0 : index
    %7 = vector.load %arg3[%c0_5, %c0_6] : memref<1x384xf32, #tpu.memory_space<vmem>>, vector<1x384xf32>
    %8 = vector.broadcast %7 : vector<1x384xf32> to vector<16x384xf32>
    %9 = arith.addf %6, %8 : vector<16x384xf32>
    %10 = vector.shape_cast %9 : vector<16x384xf32> to vector<2x8x384xf32>
    %c0_7 = arith.constant 0 : index
    %c0_8 = arith.constant 0 : index
    %c0_9 = arith.constant 0 : index
    %11 = vector.load %arg8[%c0_7, %c0_8, %c0_9] : memref<2x8x384xf32, #tpu.memory_space<vmem>>, vector<2x8x384xf32>
    tpu.vector_store %arg8[%c0_7, %c0_8, %c0_9], %10 {strides = array<i32>} : memref<2x8x384xf32, #tpu.memory_space<vmem>>, vector<2x8x384xf32>,
    %c0_i32_10 = arith.constant 0 : i32
    %c0_11 = arith.constant 0 : index
    %c0_12 = arith.constant 0 : index
    %12 = vector.load %arg7[%c0_11, %c0_12] : memref<8x128xf32, #tpu.memory_space<vmem>>, vector<8x128xf32>
    %c0_13 = arith.constant 0 : index
    %c0_14 = arith.constant 0 : index
    %13 = vector.load %arg4[%c0_13, %c0_14] : memref<128x384xf32, #tpu.memory_space<vmem>>, vector<128x384xf32>
    %cst_15 = arith.constant dense<0.000000e+00> : vector<8x384xf32>
    %14 = tpu.matmul %12, %13, %cst_15 {dimension_numbers = #tpu.dot_dimension_numbers<[1], [0], [0], [1], [0, 0, 1, 1], [], []>} : vector<8x128xf32>, vector<128x384xf32>, vector<8x384xf32> -> vector<8x384xf32>
    %c0_16 = arith.constant 0 : index
    %c0_17 = arith.constant 0 : index
    %15 = vector.load %arg5[%c0_16, %c0_17] : memref<1x384xf32, #tpu.memory_space<vmem>>, vector<1x384xf32>
    %16 = vector.broadcast %15 : vector<1x384xf32> to vector<8x384xf32>
    %17 = arith.addf %14, %16 : vector<8x384xf32>
    %18 = arith.index_cast %c0_i32_10 : i32 to index
    %c0_18 = arith.constant 0 : index
    %c0_19 = arith.constant 0 : index
    %19 = vector.load %arg8[%18, %c0_18, %c0_19] : memref<2x8x384xf32, #tpu.memory_space<vmem>>, vector<1x8x384xf32>
    %20 = vector.shape_cast %19 : vector<1x8x384xf32> to vector<8x384xf32>
    %21 = vector.extract_strided_slice %20 {offsets = [0, 0], sizes = [8, 128], strides = [1, 1]} : vector<8x384xf32> to vector<8x128xf32>
    %22 = vector.extract_strided_slice %17 {offsets = [0, 0], sizes = [8, 128], strides = [1, 1]} : vector<8x384xf32> to vector<8x128xf32>
    %23 = arith.addf %21, %22 : vector<8x128xf32>
    %24 = arith.negf %23 : vector<8x128xf32>
    %25 = math.exp %24 : vector<8x128xf32>
    %cst_20 = arith.constant 1.000000e+00 : f32
    %26 = vector.broadcast %cst_20 : f32 to vector<8x128xf32>
    %27 = arith.addf %26, %25 : vector<8x128xf32>
    %28 = arith.divf %26, %27 : vector<8x128xf32>
    %29 = vector.extract_strided_slice %20 {offsets = [0, 128], sizes = [8, 128], strides = [1, 1]} : vector<8x384xf32> to vector<8x128xf32>
    %30 = vector.extract_strided_slice %17 {offsets = [0, 128], sizes = [8, 128], strides = [1, 1]} : vector<8x384xf32> to vector<8x128xf32>
    %31 = arith.addf %29, %30 : vector<8x128xf32>
    %32 = arith.negf %31 : vector<8x128xf32>
    %33 = math.exp %32 : vector<8x128xf32>
    %cst_21 = arith.constant 1.000000e+00 : f32
    %34 = vector.broadcast %cst_21 : f32 to vector<8x128xf32>
    %35 = arith.addf %34, %33 : vector<8x128xf32>
    %36 = arith.divf %34, %35 : vector<8x128xf32>
    %37 = vector.extract_strided_slice %20 {offsets = [0, 256], sizes = [8, 128], strides = [1, 1]} : vector<8x384xf32> to vector<8x128xf32>
    %38 = vector.extract_strided_slice %17 {offsets = [0, 256], sizes = [8, 128], strides = [1, 1]} : vector<8x384xf32> to vector<8x128xf32>
    %39 = arith.mulf %28, %38 : vector<8x128xf32>
    %40 = arith.addf %37, %39 : vector<8x128xf32>
    %41 = math.tanh %40 : vector<8x128xf32>
    %cst_22 = arith.constant 1.000000e+00 : f32
    %42 = vector.broadcast %cst_22 : f32 to vector<8x128xf32>
    %43 = arith.subf %42, %36 : vector<8x128xf32>
    %44 = arith.mulf %43, %41 : vector<8x128xf32>
    %45 = arith.mulf %36, %12 : vector<8x128xf32>
    %46 = arith.addf %44, %45 : vector<8x128xf32>
    %c0_23 = arith.constant 0 : index
    %c0_24 = arith.constant 0 : index
    %47 = vector.load %arg7[%c0_23, %c0_24] : memref<8x128xf32, #tpu.memory_space<vmem>>, vector<8x128xf32>
    tpu.vector_store %arg7[%c0_23, %c0_24], %46 {strides = array<i32>} : memref<8x128xf32, #tpu.memory_space<vmem>>, vector<8x128xf32>,
    %48 = arith.index_cast %c0_i32_10 : i32 to index
    %c0_25 = arith.constant 0 : index
    %c0_26 = arith.constant 0 : index
    %49 = vector.load %arg6[%48, %c0_25, %c0_26] : memref<2x8x128xf32, #tpu.memory_space<vmem>>, vector<1x8x128xf32>
    %50 = vector.shape_cast %49 : vector<1x8x128xf32> to vector<8x128xf32>
    %51 = vector.shape_cast %46 : vector<8x128xf32> to vector<1x8x128xf32>
    tpu.vector_store %arg6[%48, %c0_25, %c0_26], %51 {strides = array<i32>} : memref<2x8x128xf32, #tpu.memory_space<vmem>>, vector<1x8x128xf32>,
    %c1_i32 = arith.constant 1 : i32
    %c0_27 = arith.constant 0 : index
    %c0_28 = arith.constant 0 : index
    %52 = vector.load %arg7[%c0_27, %c0_28] : memref<8x128xf32, #tpu.memory_space<vmem>>, vector<8x128xf32>
    %c0_29 = arith.constant 0 : index
    %c0_30 = arith.constant 0 : index
    %53 = vector.load %arg4[%c0_29, %c0_30] : memref<128x384xf32, #tpu.memory_space<vmem>>, vector<128x384xf32>
    %cst_31 = arith.constant dense<0.000000e+00> : vector<8x384xf32>
    %54 = tpu.matmul %52, %53, %cst_31 {dimension_numbers = #tpu.dot_dimension_numbers<[1], [0], [0], [1], [0, 0, 1, 1], [], []>} : vector<8x128xf32>, vector<128x384xf32>, vector<8x384xf32> -> vector<8x384xf32>
    %c0_32 = arith.constant 0 : index
    %c0_33 = arith.constant 0 : index
    %55 = vector.load %arg5[%c0_32, %c0_33] : memref<1x384xf32, #tpu.memory_space<vmem>>, vector<1x384xf32>
    %56 = vector.broadcast %55 : vector<1x384xf32> to vector<8x384xf32>
    %57 = arith.addf %54, %56 : vector<8x384xf32>
    %58 = arith.index_cast %c1_i32 : i32 to index
    %c0_34 = arith.constant 0 : index
    %c0_35 = arith.constant 0 : index
    %59 = vector.load %arg8[%58, %c0_34, %c0_35] : memref<2x8x384xf32, #tpu.memory_space<vmem>>, vector<1x8x384xf32>
    %60 = vector.shape_cast %59 : vector<1x8x384xf32> to vector<8x384xf32>
    %61 = vector.extract_strided_slice %60 {offsets = [0, 0], sizes = [8, 128], strides = [1, 1]} : vector<8x384xf32> to vector<8x128xf32>
    %62 = vector.extract_strided_slice %57 {offsets = [0, 0], sizes = [8, 128], strides = [1, 1]} : vector<8x384xf32> to vector<8x128xf32>
    %63 = arith.addf %61, %62 : vector<8x128xf32>
    %64 = arith.negf %63 : vector<8x128xf32>
    %65 = math.exp %64 : vector<8x128xf32>
    %cst_36 = arith.constant 1.000000e+00 : f32
    %66 = vector.broadcast %cst_36 : f32 to vector<8x128xf32>
    %67 = arith.addf %66, %65 : vector<8x128xf32>
    %68 = arith.divf %66, %67 : vector<8x128xf32>
    %69 = vector.extract_strided_slice %60 {offsets = [0, 128], sizes = [8, 128], strides = [1, 1]} : vector<8x384xf32> to vector<8x128xf32>
    %70 = vector.extract_strided_slice %57 {offsets = [0, 128], sizes = [8, 128], strides = [1, 1]} : vector<8x384xf32> to vector<8x128xf32>
    %71 = arith.addf %69, %70 : vector<8x128xf32>
    %72 = arith.negf %71 : vector<8x128xf32>
    %73 = math.exp %72 : vector<8x128xf32>
    %cst_37 = arith.constant 1.000000e+00 : f32
    %74 = vector.broadcast %cst_37 : f32 to vector<8x128xf32>
    %75 = arith.addf %74, %73 : vector<8x128xf32>
    %76 = arith.divf %74, %75 : vector<8x128xf32>
    %77 = vector.extract_strided_slice %60 {offsets = [0, 256], sizes = [8, 128], strides = [1, 1]} : vector<8x384xf32> to vector<8x128xf32>
    %78 = vector.extract_strided_slice %57 {offsets = [0, 256], sizes = [8, 128], strides = [1, 1]} : vector<8x384xf32> to vector<8x128xf32>
    %79 = arith.mulf %68, %78 : vector<8x128xf32>
    %80 = arith.addf %77, %79 : vector<8x128xf32>
    %81 = math.tanh %80 : vector<8x128xf32>
    %cst_38 = arith.constant 1.000000e+00 : f32
    %82 = vector.broadcast %cst_38 : f32 to vector<8x128xf32>
    %83 = arith.subf %82, %76 : vector<8x128xf32>
    %84 = arith.mulf %83, %81 : vector<8x128xf32>
    %85 = arith.mulf %76, %52 : vector<8x128xf32>
    %86 = arith.addf %84, %85 : vector<8x128xf32>
    %c0_39 = arith.constant 0 : index
    %c0_40 = arith.constant 0 : index
    %87 = vector.load %arg7[%c0_39, %c0_40] : memref<8x128xf32, #tpu.memory_space<vmem>>, vector<8x128xf32>
    tpu.vector_store %arg7[%c0_39, %c0_40], %86 {strides = array<i32>} : memref<8x128xf32, #tpu.memory_space<vmem>>, vector<8x128xf32>,
    %88 = arith.index_cast %c1_i32 : i32 to index
    %c0_41 = arith.constant 0 : index
    %c0_42 = arith.constant 0 : index
    %89 = vector.load %arg6[%88, %c0_41, %c0_42] : memref<2x8x128xf32, #tpu.memory_space<vmem>>, vector<1x8x128xf32>
    %90 = vector.shape_cast %89 : vector<1x8x128xf32> to vector<8x128xf32>
    %91 = vector.shape_cast %86 : vector<8x128xf32> to vector<1x8x128xf32>
    tpu.vector_store %arg6[%88, %c0_41, %c0_42], %91 {strides = array<i32>} : memref<2x8x128xf32, #tpu.memory_space<vmem>>, vector<1x8x128xf32>,
    %c2_i32 = arith.constant 2 : i32
    return
  }
  func.func @transform_0(%arg0: i32) -> (i32, i32, i32) {
    %c0_i32 = arith.constant 0 : i32
    %c0_i32_0 = arith.constant 0 : i32
    %c0_i32_1 = arith.constant 0 : i32
    return %arg0, %c0_i32, %c0_i32_0 : i32, i32, i32
  }
  func.func @transform_1(%arg0: i32) -> (i32, i32) {
    %c0_i32 = arith.constant 0 : i32
    %c0_i32_0 = arith.constant 0 : i32
    %c0_i32_1 = arith.constant 0 : i32
    return %c0_i32, %c0_i32_0 : i32, i32
  }
  func.func @transform_2(%arg0: i32) -> (i32, i32) {
    %c0_i32 = arith.constant 0 : i32
    %c0_i32_0 = arith.constant 0 : i32
    %c0_i32_1 = arith.constant 0 : i32
    return %c0_i32, %c0_i32_0 : i32, i32
  }
  func.func @transform_3(%arg0: i32) -> (i32, i32) {
    %c0_i32 = arith.constant 0 : i32
    %c0_i32_0 = arith.constant 0 : i32
    %c0_i32_1 = arith.constant 0 : i32
    return %c0_i32, %c0_i32_0 : i32, i32
  }
  func.func @transform_4(%arg0: i32) -> (i32, i32) {
    %c0_i32 = arith.constant 0 : i32
    %c0_i32_0 = arith.constant 0 : i32
    %c0_i32_1 = arith.constant 0 : i32
    return %c0_i32, %c0_i32_0 : i32, i32
  }
  func.func @transform_5(%arg0: i32) -> (i32, i32, i32) {
    %c0_i32 = arith.constant 0 : i32
    %c0_i32_0 = arith.constant 0 : i32
    %c0_i32_1 = arith.constant 0 : i32
    return %arg0, %c0_i32, %c0_i32_0 : i32, i32, i32
  }
}

</mosaic_0001>

<llo_original>
// kernel: _lambda_.5
$region0: #{_lambda_.5}
  #allocation0 [shape = 'u32[]', space=smem, size = 0x4, offset = 0x4, fixed_abs, tag = 'smem constant byte address 0x4 - core index']
  #allocation1 [shape = 'u32[144,128]{1,0:T(1,128)}', space=vmem, size = 0x12000, scoped, tag = 'internal scratch']
  %s0 = inlined_call_operand.vmem [shape: f32[16,128], index: 0, kind: input, shape index: {}]
  %s1 = inlined_call_operand.vmem [shape: f32[128,128], index: 1, kind: input, shape index: {}]
  %s2 = inlined_call_operand.vmem [shape: f32[1,128], index: 2, kind: input, shape index: {}]
  %s3 = inlined_call_operand.hbm [shape: f32[16,128], index: 3, kind: output, shape index: {}]
  %s4 = sld [smem:[#allocation0]]
  $region22: #{_lambda_.5} parent=0
    _
  %s6 = ssub.s32 1, %s4
  %s7 = scalar_select 0, %s6, %s4
  $region1: #{_lambda_.5} parent=0
    #allocation2 [shape = 'u8[8192]{0}', space=vmem, size = 0x2000, scoped, tag = 'output window, operand 0, single buffered']
    #allocation3 [shape = 's32[1]{0}', space=sflag, size = 0x4, scoped, tag = 'scoped memory for _lambda_.5']
    %8 = vsyncpa [#allocation3], 0
    // Predicated region
    $region2: #{_lambda_.5} parent=1 // pred_check
      _
    $region3: #{_lambda_.5} parent=1 // pred_check_branch
      %10 = sbr.rel (0) target = $region5
    $region4: #{_lambda_.5} parent=1 // pred_region
      _
    $region5: #{_lambda_.5} parent=1 // pred_fallthru
      _
    // Predicated region
    $region6: #{_lambda_.5} parent=1 // pred_check
      _
    $region7: #{_lambda_.5} parent=1 // pred_check_branch
      %12 = sbr.rel (0) target = $region9
    $region8: #{_lambda_.5} parent=1 // pred_region
      _
    $region9: #{_lambda_.5} parent=1 // pred_fallthru
      _
    // Predicated region
    $region10: #{_lambda_.5} parent=1 // pred_check
      _
    $region11: #{_lambda_.5} parent=1 // pred_check_branch
      %14 = sbr.rel (0) target = $region13
    $region12: #{_lambda_.5} parent=1 // pred_region
      _
    $region13: #{_lambda_.5} parent=1 // pred_fallthru
      _
    %v15 = vld [vmem:[%s0] sm:$0xff]
    %v16 = vld [vmem:[%s0 + $0x8] sm:$0xff]
    %v17 = vld [vmem:[%s1] sm:$0xff]
    %v18 = vld [vmem:[%s1 + $0x8] sm:$0xff]
    %v19 = vld [vmem:[%s1 + $0x10] sm:$0xff]
    %v20 = vld [vmem:[%s1 + $0x18] sm:$0xff]
    %v21 = vld [vmem:[%s1 + $0x20] sm:$0xff]
    %v22 = vld [vmem:[%s1 + $0x28] sm:$0xff]
    %v23 = vld [vmem:[%s1 + $0x30] sm:$0xff]
    %v24 = vld [vmem:[%s1 + $0x38] sm:$0xff]
    %v25 = vld [vmem:[%s1 + $0x40] sm:$0xff]
    %v26 = vld [vmem:[%s1 + $0x48] sm:$0xff]
    %v27 = vld [vmem:[%s1 + $0x50] sm:$0xff]
    %v28 = vld [vmem:[%s1 + $0x58] sm:$0xff]
    %v29 = vld [vmem:[%s1 + $0x60] sm:$0xff]
    %v30 = vld [vmem:[%s1 + $0x68] sm:$0xff]
    %v31 = vld [vmem:[%s1 + $0x70] sm:$0xff]
    %v32 = vld [vmem:[%s1 + $0x78] sm:$0xff]
    %v33 = vld [vmem:[%s2] sm:$0x1]
    %v35 = vlaneseq
    %v36 = vshrl.u32 %v35, 7
    %v37 = vsub.s32 0, %v36
    %v38 = vrot.slane %v33, %v37
    %40 = vmatprep.subr.mxu0 0.0
    %41 = vmatpush1.msra.mxu0 %v17
    %42 = vmatprep.subr.mxu0 0.0
    %43 = vmatpush1.msra.mxu0 %v18
    %44 = vmatprep.subr.mxu0 0.0
    %45 = vmatpush1.msra.mxu0 %v19
    %46 = vmatprep.subr.mxu0 0.0
    %47 = vmatpush1.msra.mxu0 %v20
    %48 = vmatprep.subr.mxu0 0.0
    %49 = vmatpush1.msra.mxu0 %v21
    %50 = vmatprep.subr.mxu0 0.0
    %51 = vmatpush1.msra.mxu0 %v22
    %52 = vmatprep.subr.mxu0 0.0
    %53 = vmatpush1.msra.mxu0 %v23
    %54 = vmatprep.subr.mxu0 0.0
    %55 = vmatpush1.msra.mxu0 %v24
    %56 = vmatprep.subr.mxu0 0.0
    %57 = vmatpush1.msra.mxu0 %v25
    %58 = vmatprep.subr.mxu0 0.0
    %59 = vmatpush1.msra.mxu0 %v26
    %60 = vmatprep.subr.mxu0 0.0
    %61 = vmatpush1.msra.mxu0 %v27
    %62 = vmatprep.subr.mxu0 0.0
    %63 = vmatpush1.msra.mxu0 %v28
    %64 = vmatprep.subr.mxu0 0.0
    %65 = vmatpush1.msra.mxu0 %v29
    %66 = vmatprep.subr.mxu0 0.0
    %67 = vmatpush1.msra.mxu0 %v30
    %68 = vmatprep.subr.mxu0 0.0
    %69 = vmatpush1.msra.mxu0 %v31
    %70 = vmatprep.subr.mxu0 0.0
    %71 = vmatpush1.msra.mxu0 %v32
    %72 = vmatprep.subr.mxu0 0.0
    %73 = vmatpush1.msra.mxu0 0.0
    %74 = vmatprep.subr.mxu0 0.0
    %75 = vmatpush1.msra.mxu0 0.0
    %76 = vmatprep.subr.mxu0 0.0
    %77 = vmatpush1.msra.mxu0 0.0
    %78 = vmatprep.subr.mxu0 0.0
    %79 = vmatpush1.msra.mxu0 0.0
    %80 = vmatprep.subr.mxu0 0.0
    %81 = vmatpush1.msra.mxu0 0.0
    %82 = vmatprep.subr.mxu0 0.0
    %83 = vmatpush1.msra.mxu0 0.0
    %84 = vmatprep.subr.mxu0 0.0
    %85 = vmatpush1.msra.mxu0 0.0
    %86 = vmatprep.subr.mxu0 0.0
    %87 = vmatpush1.msra.mxu0 0.0
    %88 = vmatprep.subr.mxu0 0.0
    %89 = vmatpush1.msra.mxu0 0.0
    %90 = vmatprep.subr.mxu0 0.0
    %91 = vmatpush1.msra.mxu0 0.0
    %92 = vmatprep.subr.mxu0 0.0
    %93 = vmatpush1.msra.mxu0 0.0
    %94 = vmatprep.subr.mxu0 0.0
    %95 = vmatpush1.msra.mxu0 0.0
    %96 = vmatprep.subr.mxu0 0.0
    %97 = vmatpush1.msra.mxu0 0.0
    %98 = vmatprep.subr.mxu0 0.0
    %99 = vmatpush1.msra.mxu0 0.0
    %100 = vmatprep.subr.mxu0 0.0
    %101 = vmatpush1.msra.mxu0 0.0
    %102 = vmatprep.subr.mxu0 0.0
    %103 = vmatpush1.msra.mxu0 0.0
    %104 = vmatprep.mubr.f32.mxu0 0.0
    %105 = vmatmul.mubr.f32.gmra.mrb[0].mxu0 %v15
    %v106 = vpop.f32.mrb[0].mxu0
    %v107 = vadd.f32 %v38, %v106
    %v108 = vpop.f32.mrb[0].mxu0
    %109 = vmatprep.mubr.f32.mxu0 0.0
    %110 = vmatmul.mubr.f32.gmra.mrb[0].mxu0 %v16
    %v111 = vpop.f32.mrb[0].mxu0
    %v112 = vadd.f32 %v38, %v111
    %v113 = vpop.f32.mrb[0].mxu0
    %114 = vdwg.mxu0
    %115 = vmax.xlane.f32.xlu0 %v107
    %v116 = vpop.xlane.xlu0 %115
    %117 = vmax.xlane.f32.xlu0 %v112
    %v118 = vpop.xlane.xlu0 %117
    %v119 = vsub.f32 %v107, %v116
    %v120 = vsub.f32 %v112, %v118
    %v121 = vmul.f32 %v119, 1.442695
    %v122 = vpow.pop %v121
    %v123 = vmul.f32 %v120, 1.442695
    %v124 = vpow.pop %v123
    %125 = vadd.xlane.f32.xlu0 %v122
    %v126 = vpop.xlane.xlu0 %125
    %127 = vadd.xlane.f32.xlu0 %v124
    %v128 = vpop.xlane.xlu0 %127
    %v129 = vlog2.pop %v126
    %v130 = vmul.f32 %v129, 0.6931472
    %v131 = vlog2.pop %v128
    %v132 = vmul.f32 %v131, 0.6931472
    %v133 = vadd.f32 %v130, %v116
    %v134 = vadd.f32 %v132, %v118
    %v135 = vsub.f32 %v107, %v133
    %v136 = vsub.f32 %v112, %v134
    %137 = vst [vmem:[#allocation2] sm:$0xff] %v135
    %138 = vst [vmem:[#allocation2 + $0x8] sm:$0xff] %v136
    // Predicated region
    $region14: #{_lambda_.5} parent=1 // pred_check
      _
    $region15: #{_lambda_.5} parent=1 // pred_check_branch
      %140 = sbr.rel (0) target = $region17
    $region16: #{_lambda_.5} parent=1 // pred_region
      %s142 = ssub.s32 256, 256
      %143 = vsyncadd [#allocation3], %s142
      %s144 = sshll.u32 [#allocation2], 4
      %s145 = int_to_ptr.vmem [resolvable:$true] %s144
      %150 = dma.vmem_to_hbm [thread:$0]  %s145, 256, %s3, [#allocation3], 128, 128, 8
    $region17: #{_lambda_.5} parent=1 // pred_fallthru
      _
    // Predicated region
    $region18: #{_lambda_.5} parent=1 // pred_check
      _
    $region19: #{_lambda_.5} parent=1 // pred_check_branch
      %152 = sbr.rel (0) target = $region21
    $region20: #{_lambda_.5} parent=1 // pred_region
      %153 = dma.done [#allocation3], 256
    $region21: #{_lambda_.5} parent=1 // pred_fallthru
      _
    %154 = vsyncpa [#allocation3], 1

// kernel: _lambda_.3
$region0: #{_lambda_.3}
  #allocation0 [shape = 'u32[]', space=smem, size = 0x4, offset = 0x4, fixed_abs, tag = 'smem constant byte address 0x4 - core index']
  #allocation1 [shape = 'u32[144,128]{1,0:T(1,128)}', space=vmem, size = 0x12000, scoped, tag = 'internal scratch']
  #allocation2 [shape = 'f32[8,128]{1,0:T(8,128)}', space=vmem, size = 0x1000, scoped, tag = 'scratch operand']
  #allocation3 [shape = 'f32[2,8,384]{2,1,0:T(8,128)}', space=vmem, size = 0x6000, scoped, tag = 'scratch operand']
  %s0 = inlined_call_operand.vmem [shape: f32[2,8,16], index: 0, kind: input, shape index: {}]
  %s1 = inlined_call_operand.vmem [shape: f32[16,384], index: 1, kind: input, shape index: {}]
  %s2 = inlined_call_operand.vmem [shape: f32[1,384], index: 2, kind: input, shape index: {}]
  %s3 = inlined_call_operand.hbm [shape: f32[128,384], index: 3, kind: input, shape index: {}]
  %s4 = inlined_call_operand.vmem [shape: f32[1,384], index: 4, kind: input, shape index: {}]
  %s5 = inlined_call_operand.vmem [shape: f32[2,8,128], index: 5, kind: output, shape index: {}]
  %s6 = sld [smem:[#allocation0]]
  $region38: #{_lambda_.3} parent=0
    _
  %s8 = ssub.s32 1, %s6
  %s9 = scalar_select 0, %s8, %s6
  $region1: #{_lambda_.3} parent=0
    #allocation4 [shape = 'u8[196608]{0}', space=vmem, size = 0x30000, scoped, tag = 'input window, operand 3, single buffered']
    #allocation5 [shape = 's32[1]{0}', space=sflag, size = 0x4, scoped, tag = 'scoped memory for _lambda_.3']
    %10 = vsyncpa [#allocation5], 0
    // Predicated region
    $region2: #{_lambda_.3} parent=1 // pred_check
      _
    $region3: #{_lambda_.3} parent=1 // pred_check_branch
      %12 = sbr.rel (0) target = $region5
    $region4: #{_lambda_.3} parent=1 // pred_region
      _
    $region5: #{_lambda_.3} parent=1 // pred_fallthru
      _
    // Predicated region
    $region6: #{_lambda_.3} parent=1 // pred_check
      _
    $region7: #{_lambda_.3} parent=1 // pred_check_branch
      %14 = sbr.rel (0) target = $region9
    $region8: #{_lambda_.3} parent=1 // pred_region
      _
    $region9: #{_lambda_.3} parent=1 // pred_fallthru
      _
    // Predicated region
    $region10: #{_lambda_.3} parent=1 // pred_check
      _
    $region11: #{_lambda_.3} parent=1 // pred_check_branch
      %16 = sbr.rel (0) target = $region13
    $region12: #{_lambda_.3} parent=1 // pred_region
      _
    $region13: #{_lambda_.3} parent=1 // pred_fallthru
      _
    // Predicated region
    $region14: #{_lambda_.3} parent=1 // pred_check
      _
    $region15: #{_lambda_.3} parent=1 // pred_check_branch
      %18 = sbr.rel (0) target = $region17
    $region16: #{_lambda_.3} parent=1 // pred_region
      %s20 = ssub.s32 6144, 6144
      %21 = vsyncadd [#allocation5], %s20
      %s22 = sshll.u32 [#allocation4], 4
      %s23 = int_to_ptr.vmem [resolvable:$true] %s22
      %28 = dma.hbm_to_vmem [thread:$0]  %s3, 6144, %s23, [#allocation5], 384, 384, 24
    $region17: #{_lambda_.3} parent=1 // pred_fallthru
      _
    // Predicated region
    $region18: #{_lambda_.3} parent=1 // pred_check
      _
    $region19: #{_lambda_.3} parent=1 // pred_check_branch
      %30 = sbr.rel (0) target = $region21
    $region20: #{_lambda_.3} parent=1 // pred_region
      _
    $region21: #{_lambda_.3} parent=1 // pred_fallthru
      _
    // Predicated region
    $region22: #{_lambda_.3} parent=1 // pred_check
      _
    $region23: #{_lambda_.3} parent=1 // pred_check_branch
      %32 = sbr.rel (0) target = $region25
    $region24: #{_lambda_.3} parent=1 // pred_region
      %33 = dma.done [#allocation5], 6144
    $region25: #{_lambda_.3} parent=1 // pred_fallthru
      _
    %p34 = scmp.eq.s32.totalorder 0, 0
    // Predicated region
    $region26: #{_lambda_.3} parent=1 // pred_check
      %p35 = pneg %p34
    $region27: #{_lambda_.3} parent=1 // pred_check_branch
      %37 = sbr.rel (%p35) target = $region29
    $region28: #{_lambda_.3} parent=1 // pred_region
      %38 = vst [vmem:[#allocation2] sm:$0xff] 0.0
    $region29: #{_lambda_.3} parent=1 // pred_fallthru
      _
    %v39 = vld [vmem:[%s0] sm:$0xff]
    %v40 = vld [vmem:[%s0 + $0x8] sm:$0xff]
    %v41 = vld [vmem:[%s1] sm:$0xff]
    %v42 = vld [vmem:[%s1 + $0x8] sm:$0xff]
    %v43 = vld [vmem:[%s1 + $0x10] sm:$0xff]
    %v44 = vld [vmem:[%s1 + $0x18] sm:$0xff]
    %v45 = vld [vmem:[%s1 + $0x20] sm:$0xff]
    %v46 = vld [vmem:[%s1 + $0x28] sm:$0xff]
    %v47 = vld [vmem:[%s2] sm:$0x7]
    %v49 = vlaneseq
    %v50 = vshrl.u32 %v49, 7
    %v51 = vsub.s32 0, %v50
    %v52 = vrot.slane %v47, %v51
    %v53 = vlaneseq
    %v54 = vshrl.u32 %v53, 7
    %v55 = vsub.s32 1, %v54
    %v56 = vrot.slane %v47, %v55
    %v57 = vlaneseq
    %v58 = vshrl.u32 %v57, 7
    %v59 = vsub.s32 2, %v58
    %v60 = vrot.slane %v47, %v59
    %vm64 = vcmask 130048
    %v66 = vsel %vm64, %v39, 0
    %v69 = vsel %vm64, %v40, 0
    %71 = vmatprep.subr.mxu0 %v42
    %72 = vmatpush1.msra.mxu0 %v41
    %73 = vmatprep.subr.mxu0 %v45
    %74 = vmatpush1.msra.mxu0 %v44
    %75 = vmatprep.subr.mxu0 0.0
    %76 = vmatpush1.msra.mxu0 0.0
    %77 = vmatprep.subr.mxu0 0.0
    %78 = vmatpush1.msra.mxu0 0.0
    %79 = vmatprep.subr.mxu0 0.0
    %80 = vmatpush1.msra.mxu0 0.0
    %81 = vmatprep.subr.mxu0 0.0
    %82 = vmatpush1.msra.mxu0 0.0
    %83 = vmatprep.subr.mxu0 0.0
    %84 = vmatpush1.msra.mxu0 0.0
    %85 = vmatprep.subr.mxu0 0.0
    %86 = vmatpush1.msra.mxu0 0.0
    %87 = vmatprep.subr.mxu0 0.0
    %88 = vmatpush1.msra.mxu0 0.0
    %89 = vmatprep.subr.mxu0 0.0
    %90 = vmatpush1.msra.mxu0 0.0
    %91 = vmatprep.subr.mxu0 0.0
    %92 = vmatpush1.msra.mxu0 0.0
    %93 = vmatprep.subr.mxu0 0.0
    %94 = vmatpush1.msra.mxu0 0.0
    %95 = vmatprep.subr.mxu0 0.0
    %96 = vmatpush1.msra.mxu0 0.0
    %97 = vmatprep.subr.mxu0 0.0
    %98 = vmatpush1.msra.mxu0 0.0
    %99 = vmatprep.subr.mxu0 0.0
    %100 = vmatpush1.msra.mxu0 0.0
    %101 = vmatprep.subr.mxu0 0.0
    %102 = vmatpush1.msra.mxu0 0.0
    %103 = vmatprep.subr.mxu0 0.0
    %104 = vmatpush1.msra.mxu0 0.0
    %105 = vmatprep.subr.mxu0 0.0
    %106 = vmatpush1.msra.mxu0 0.0
    %107 = vmatprep.subr.mxu0 0.0
    %108 = vmatpush1.msra.mxu0 0.0
    %109 = vmatprep.subr.mxu0 0.0
    %110 = vmatpush1.msra.mxu0 0.0
    %111 = vmatprep.subr.mxu0 0.0
    %112 = vmatpush1.msra.mxu0 0.0
    %113 = vmatprep.subr.mxu0 0.0
    %114 = vmatpush1.msra.mxu0 0.0
    %115 = vmatprep.subr.mxu0 0.0
    %116 = vmatpush1.msra.mxu0 0.0
    %117 = vmatprep.subr.mxu0 0.0
    %118 = vmatpush1.msra.mxu0 0.0
    %119 = vmatprep.subr.mxu0 0.0
    %120 = vmatpush1.msra.mxu0 0.0
    %121 = vmatprep.subr.mxu0 0.0
    %122 = vmatpush1.msra.mxu0 0.0
    %123 = vmatprep.subr.mxu0 0.0
    %124 = vmatpush1.msra.mxu0 0.0
    %125 = vmatprep.subr.mxu0 0.0
    %126 = vmatpush1.msra.mxu0 0.0
    %127 = vmatprep.subr.mxu0 0.0
    %128 = vmatpush1.msra.mxu0 0.0
    %129 = vmatprep.subr.mxu0 0.0
    %130 = vmatpush1.msra.mxu0 0.0
    %131 = vmatprep.subr.mxu0 0.0
    %132 = vmatpush1.msra.mxu0 0.0
    %133 = vmatprep.subr.mxu0 0.0
    %134 = vmatpush1.msra.mxu0 0.0
    %135 = vmatprep.mubr.f32.mxu0 0.0
    %136 = vmatmul.mubr.f32.gmra.mrb[0].mxu0 %v66
    %v137 = vpop.f32.mrb[0].mxu0
    %v138 = vadd.f32 %v52, %v137
    %v139 = vpop.f32.mrb[0].mxu0
    %v140 = vadd.f32 %v56, %v139
    %141 = vmatprep.mubr.f32.mxu0 0.0
    %142 = vmatmul.mubr.f32.gmra.mrb[0].mxu0 %v69
    %v143 = vpop.f32.mrb[0].mxu0
    %v144 = vadd.f32 %v52, %v143
    %v145 = vpop.f32.mrb[0].mxu0
    %v146 = vadd.f32 %v56, %v145
    %147 = vdwg.mxu0
    %148 = vmatprep.subr.mxu0 0.0
    %149 = vmatpush1.msra.mxu0 %v43
    %150 = vmatprep.subr.mxu0 0.0
    %151 = vmatpush1.msra.mxu0 %v46
    %152 = vmatprep.subr.mxu0 0.0
    %153 = vmatpush1.msra.mxu0 0.0
    %154 = vmatprep.subr.mxu0 0.0
    %155 = vmatpush1.msra.mxu0 0.0
    %156 = vmatprep.subr.mxu0 0.0
    %157 = vmatpush1.msra.mxu0 0.0
    %158 = vmatprep.subr.mxu0 0.0
    %159 = vmatpush1.msra.mxu0 0.0
    %160 = vmatprep.subr.mxu0 0.0
    %161 = vmatpush1.msra.mxu0 0.0
    %162 = vmatprep.subr.mxu0 0.0
    %163 = vmatpush1.msra.mxu0 0.0
    %164 = vmatprep.subr.mxu0 0.0
    %165 = vmatpush1.msra.mxu0 0.0
    %166 = vmatprep.subr.mxu0 0.0
    %167 = vmatpush1.msra.mxu0 0.0
    %168 = vmatprep.subr.mxu0 0.0
    %169 = vmatpush1.msra.mxu0 0.0
    %170 = vmatprep.subr.mxu0 0.0
    %171 = vmatpush1.msra.mxu0 0.0
    %172 = vmatprep.subr.mxu0 0.0
    %173 = vmatpush1.msra.mxu0 0.0
    %174 = vmatprep.subr.mxu0 0.0
    %175 = vmatpush1.msra.mxu0 0.0
    %176 = vmatprep.subr.mxu0 0.0
    %177 = vmatpush1.msra.mxu0 0.0
    %178 = vmatprep.subr.mxu0 0.0
    %179 = vmatpush1.msra.mxu0 0.0
    %180 = vmatprep.subr.mxu0 0.0
    %181 = vmatpush1.msra.mxu0 0.0
    %182 = vmatprep.subr.mxu0 0.0
    %183 = vmatpush1.msra.mxu0 0.0
    %184 = vmatprep.subr.mxu0 0.0
    %185 = vmatpush1.msra.mxu0 0.0
    %186 = vmatprep.subr.mxu0 0.0
    %187 = vmatpush1.msra.mxu0 0.0
    %188 = vmatprep.subr.mxu0 0.0
    %189 = vmatpush1.msra.mxu0 0.0
    %190 = vmatprep.subr.mxu0 0.0
    %191 = vmatpush1.msra.mxu0 0.0
    %192 = vmatprep.subr.mxu0 0.0
    %193 = vmatpush1.msra.mxu0 0.0
    %194 = vmatprep.subr.mxu0 0.0
    %195 = vmatpush1.msra.mxu0 0.0
    %196 = vmatprep.subr.mxu0 0.0
    %197 = vmatpush1.msra.mxu0 0.0
    %198 = vmatprep.subr.mxu0 0.0
    %199 = vmatpush1.msra.mxu0 0.0
    %200 = vmatprep.subr.mxu0 0.0
    %201 = vmatpush1.msra.mxu0 0.0
    %202 = vmatprep.subr.mxu0 0.0
    %203 = vmatpush1.msra.mxu0 0.0
    %204 = vmatprep.subr.mxu0 0.0
    %205 = vmatpush1.msra.mxu0 0.0
    %206 = vmatprep.subr.mxu0 0.0
    %207 = vmatpush1.msra.mxu0 0.0
    %208 = vmatprep.subr.mxu0 0.0
    %209 = vmatpush1.msra.mxu0 0.0
    %210 = vmatprep.subr.mxu0 0.0
    %211 = vmatpush1.msra.mxu0 0.0
    %212 = vmatprep.mubr.f32.mxu0 0.0
    %213 = vmatmul.mubr.f32.gmra.mrb[0].mxu0 %v66
    %v214 = vpop.f32.mrb[0].mxu0
    %v215 = vadd.f32 %v60, %v214
    %v216 = vpop.f32.mrb[0].mxu0
    %217 = vmatprep.mubr.f32.mxu0 0.0
    %218 = vmatmul.mubr.f32.gmra.mrb[0].mxu0 %v69
    %v219 = vpop.f32.mrb[0].mxu0
    %v220 = vadd.f32 %v60, %v219
    %v221 = vpop.f32.mrb[0].mxu0
    %222 = vdwg.mxu0
    %223 = vst [vmem:[#allocation3] sm:$0xff] %v138
    %224 = vst [vmem:[#allocation3 + $0x8] sm:$0xff] %v140
    %225 = vst [vmem:[#allocation3 + $0x10] sm:$0xff] %v215
    %226 = vst [vmem:[#allocation3 + $0x18] sm:$0xff] %v144
    %227 = vst [vmem:[#allocation3 + $0x20] sm:$0xff] %v146
    %228 = vst [vmem:[#allocation3 + $0x28] sm:$0xff] %v220
    %v229 = vld [vmem:[#allocation2] sm:$0xff]
    %v230 = vld [vmem:[#allocation4] sm:$0xff]
    %v231 = vld [vmem:[#allocation4 + $0x8] sm:$0xff]
    %v232 = vld [vmem:[#allocation4 + $0x10] sm:$0xff]
    %v233 = vld [vmem:[#allocation4 + $0x18] sm:$0xff]
    %v234 = vld [vmem:[#allocation4 + $0x20] sm:$0xff]
    %v235 = vld [vmem:[#allocation4 + $0x28] sm:$0xff]
    %v236 = vld [vmem:[#allocation4 + $0x30] sm:$0xff]
    %v237 = vld [vmem:[#allocation4 + $0x38] sm:$0xff]
    %v238 = vld [vmem:[#allocation4 + $0x40] sm:$0xff]
    %v239 = vld [vmem:[#allocation4 + $0x48] sm:$0xff]
    %v240 = vld [vmem:[#allocation4 + $0x50] sm:$0xff]
    %v241 = vld [vmem:[#allocation4 + $0x58] sm:$0xff]
    %v242 = vld [vmem:[#allocation4 + $0x60] sm:$0xff]
    %v243 = vld [vmem:[#allocation4 + $0x68] sm:$0xff]
    %v244 = vld [vmem:[#allocation4 + $0x70] sm:$0xff]
    %v245 = vld [vmem:[#allocation4 + $0x78] sm:$0xff]
    %v246 = vld [vmem:[#allocation4 + $0x80] sm:$0xff]
    %v247 = vld [vmem:[#allocation4 + $0x88] sm:$0xff]
    %v248 = vld [vmem:[#allocation4 + $0x90] sm:$0xff]
    %v249 = vld [vmem:[#allocation4 + $0x98] sm:$0xff]
    %v250 = vld [vmem:[#allocation4 + $0xa0] sm:$0xff]
    %v251 = vld [vmem:[#allocation4 + $0xa8] sm:$0xff]
    %v252 = vld [vmem:[#allocation4 + $0xb0] sm:$0xff]
    %v253 = vld [vmem:[#allocation4 + $0xb8] sm:$0xff]
    %v254 = vld [vmem:[#allocation4 + $0xc0] sm:$0xff]
    %v255 = vld [vmem:[#allocation4 + $0xc8] sm:$0xff]
    %v256 = vld [vmem:[#allocation4 + $0xd0] sm:$0xff]
    %v257 = vld [vmem:[#allocation4 + $0xd8] sm:$0xff]
    %v258 = vld [vmem:[#allocation4 + $0xe0] sm:$0xff]
    %v259 = vld [vmem:[#allocation4 + $0xe8] sm:$0xff]
    %v260 = vld [vmem:[#allocation4 + $0xf0] sm:$0xff]
    %v261 = vld [vmem:[#allocation4 + $0xf8] sm:$0xff]
    %v262 = vld [vmem:[#allocation4 + $0x100] sm:$0xff]
    %v263 = vld [vmem:[#allocation4 + $0x108] sm:$0xff]
    %v264 = vld [vmem:[#allocation4 + $0x110] sm:$0xff]
    %v265 = vld [vmem:[#allocation4 + $0x118] sm:$0xff]
    %v266 = vld [vmem:[#allocation4 + $0x120] sm:$0xff]
    %v267 = vld [vmem:[#allocation4 + $0x128] sm:$0xff]
    %v268 = vld [vmem:[#allocation4 + $0x130] sm:$0xff]
    %v269 = vld [vmem:[#allocation4 + $0x138] sm:$0xff]
    %v270 = vld [vmem:[#allocation4 + $0x140] sm:$0xff]
    %v271 = vld [vmem:[#allocation4 + $0x148] sm:$0xff]
    %v272 = vld [vmem:[#allocation4 + $0x150] sm:$0xff]
    %v273 = vld [vmem:[#allocation4 + $0x158] sm:$0xff]
    %v274 = vld [vmem:[#allocation4 + $0x160] sm:$0xff]
    %v275 = vld [vmem:[#allocation4 + $0x168] sm:$0xff]
    %v276 = vld [vmem:[#allocation4 + $0x170] sm:$0xff]
    %v277 = vld [vmem:[#allocation4 + $0x178] sm:$0xff]
    %v278 = vld [vmem:[%s4] sm:$0x7]
    %v280 = vlaneseq
    %v281 = vshrl.u32 %v280, 7
    %v282 = vsub.s32 0, %v281
    %v283 = vrot.slane %v278, %v282
    %v284 = vlaneseq
    %v285 = vshrl.u32 %v284, 7
    %v286 = vsub.s32 1, %v285
    %v287 = vrot.slane %v278, %v286
    %v288 = vlaneseq
    %v289 = vshrl.u32 %v288, 7
    %v290 = vsub.s32 2, %v289
    %v291 = vrot.slane %v278, %v290
    %295 = vmatprep.subr.mxu0 %v231
    %296 = vmatpush1.msra.mxu0 %v230
    %297 = vmatprep.subr.mxu0 %v234
    %298 = vmatpush1.msra.mxu0 %v233
    %299 = vmatprep.subr.mxu0 %v237
    %300 = vmatpush1.msra.mxu0 %v236
    %301 = vmatprep.subr.mxu0 %v240
    %302 = vmatpush1.msra.mxu0 %v239
    %303 = vmatprep.subr.mxu0 %v243
    %304 = vmatpush1.msra.mxu0 %v242
    %305 = vmatprep.subr.mxu0 %v246
    %306 = vmatpush1.msra.mxu0 %v245
    %307 = vmatprep.subr.mxu0 %v249
    %308 = vmatpush1.msra.mxu0 %v248
    %309 = vmatprep.subr.mxu0 %v252
    %310 = vmatpush1.msra.mxu0 %v251
    %311 = vmatprep.subr.mxu0 %v255
    %312 = vmatpush1.msra.mxu0 %v254
    %313 = vmatprep.subr.mxu0 %v258
    %314 = vmatpush1.msra.mxu0 %v257
    %315 = vmatprep.subr.mxu0 %v261
    %316 = vmatpush1.msra.mxu0 %v260
    %317 = vmatprep.subr.mxu0 %v264
    %318 = vmatpush1.msra.mxu0 %v263
    %319 = vmatprep.subr.mxu0 %v267
    %320 = vmatpush1.msra.mxu0 %v266
    %321 = vmatprep.subr.mxu0 %v270
    %322 = vmatpush1.msra.mxu0 %v269
    %323 = vmatprep.subr.mxu0 %v273
    %324 = vmatpush1.msra.mxu0 %v272
    %325 = vmatprep.subr.mxu0 %v276
    %326 = vmatpush1.msra.mxu0 %v275
    %327 = vmatprep.subr.mxu0 0.0
    %328 = vmatpush1.msra.mxu0 0.0
    %329 = vmatprep.subr.mxu0 0.0
    %330 = vmatpush1.msra.mxu0 0.0
    %331 = vmatprep.subr.mxu0 0.0
    %332 = vmatpush1.msra.mxu0 0.0
    %333 = vmatprep.subr.mxu0 0.0
    %334 = vmatpush1.msra.mxu0 0.0
    %335 = vmatprep.subr.mxu0 0.0
    %336 = vmatpush1.msra.mxu0 0.0
    %337 = vmatprep.subr.mxu0 0.0
    %338 = vmatpush1.msra.mxu0 0.0
    %339 = vmatprep.subr.mxu0 0.0
    %340 = vmatpush1.msra.mxu0 0.0
    %341 = vmatprep.subr.mxu0 0.0
    %342 = vmatpush1.msra.mxu0 0.0
    %343 = vmatprep.subr.mxu0 0.0
    %344 = vmatpush1.msra.mxu0 0.0
    %345 = vmatprep.subr.mxu0 0.0
    %346 = vmatpush1.msra.mxu0 0.0
    %347 = vmatprep.subr.mxu0 0.0
    %348 = vmatpush1.msra.mxu0 0.0
    %349 = vmatprep.subr.mxu0 0.0
    %350 = vmatpush1.msra.mxu0 0.0
    %351 = vmatprep.subr.mxu0 0.0
    %352 = vmatpush1.msra.mxu0 0.0
    %353 = vmatprep.subr.mxu0 0.0
    %354 = vmatpush1.msra.mxu0 0.0
    %355 = vmatprep.subr.mxu0 0.0
    %356 = vmatpush1.msra.mxu0 0.0
    %357 = vmatprep.subr.mxu0 0.0
    %358 = vmatpush1.msra.mxu0 0.0
    %359 = vmatprep.mubr.f32.mxu0 0.0
    %360 = vmatmul.mubr.f32.gmra.mrb[0].mxu0 %v229
    %v361 = vpop.f32.mrb[0].mxu0
    %v362 = vadd.f32 %v283, %v361
    %v363 = vpop.f32.mrb[0].mxu0
    %v364 = vadd.f32 %v287, %v363
    %365 = vdwg.mxu0
    %366 = vmatprep.subr.mxu0 0.0
    %367 = vmatpush1.msra.mxu0 %v232
    %368 = vmatprep.subr.mxu0 0.0
    %369 = vmatpush1.msra.mxu0 %v235
    %370 = vmatprep.subr.mxu0 0.0
    %371 = vmatpush1.msra.mxu0 %v238
    %372 = vmatprep.subr.mxu0 0.0
    %373 = vmatpush1.msra.mxu0 %v241
    %374 = vmatprep.subr.mxu0 0.0
    %375 = vmatpush1.msra.mxu0 %v244
    %376 = vmatprep.subr.mxu0 0.0
    %377 = vmatpush1.msra.mxu0 %v247
    %378 = vmatprep.subr.mxu0 0.0
    %379 = vmatpush1.msra.mxu0 %v250
    %380 = vmatprep.subr.mxu0 0.0
    %381 = vmatpush1.msra.mxu0 %v253
    %382 = vmatprep.subr.mxu0 0.0
    %383 = vmatpush1.msra.mxu0 %v256
    %384 = vmatprep.subr.mxu0 0.0
    %385 = vmatpush1.msra.mxu0 %v259
    %386 = vmatprep.subr.mxu0 0.0
    %387 = vmatpush1.msra.mxu0 %v262
    %388 = vmatprep.subr.mxu0 0.0
    %389 = vmatpush1.msra.mxu0 %v265
    %390 = vmatprep.subr.mxu0 0.0
    %391 = vmatpush1.msra.mxu0 %v268
    %392 = vmatprep.subr.mxu0 0.0
    %393 = vmatpush1.msra.mxu0 %v271
    %394 = vmatprep.subr.mxu0 0.0
    %395 = vmatpush1.msra.mxu0 %v274
    %396 = vmatprep.subr.mxu0 0.0
    %397 = vmatpush1.msra.mxu0 %v277
    %398 = vmatprep.subr.mxu0 0.0
    %399 = vmatpush1.msra.mxu0 0.0
    %400 = vmatprep.subr.mxu0 0.0
    %401 = vmatpush1.msra.mxu0 0.0
    %402 = vmatprep.subr.mxu0 0.0
    %403 = vmatpush1.msra.mxu0 0.0
    %404 = vmatprep.subr.mxu0 0.0
    %405 = vmatpush1.msra.mxu0 0.0
    %406 = vmatprep.subr.mxu0 0.0
    %407 = vmatpush1.msra.mxu0 0.0
    %408 = vmatprep.subr.mxu0 0.0
    %409 = vmatpush1.msra.mxu0 0.0
    %410 = vmatprep.subr.mxu0 0.0
    %411 = vmatpush1.msra.mxu0 0.0
    %412 = vmatprep.subr.mxu0 0.0
    %413 = vmatpush1.msra.mxu0 0.0
    %414 = vmatprep.subr.mxu0 0.0
    %415 = vmatpush1.msra.mxu0 0.0
    %416 = vmatprep.subr.mxu0 0.0
    %417 = vmatpush1.msra.mxu0 0.0
    %418 = vmatprep.subr.mxu0 0.0
    %419 = vmatpush1.msra.mxu0 0.0
    %420 = vmatprep.subr.mxu0 0.0
    %421 = vmatpush1.msra.mxu0 0.0
    %422 = vmatprep.subr.mxu0 0.0
    %423 = vmatpush1.msra.mxu0 0.0
    %424 = vmatprep.subr.mxu0 0.0
    %425 = vmatpush1.msra.mxu0 0.0
    %426 = vmatprep.subr.mxu0 0.0
    %427 = vmatpush1.msra.mxu0 0.0
    %428 = vmatprep.subr.mxu0 0.0
    %429 = vmatpush1.msra.mxu0 0.0
    %430 = vmatprep.mubr.f32.mxu0 0.0
    %431 = vmatmul.mubr.f32.gmra.mrb[0].mxu0 %v229
    %v432 = vpop.f32.mrb[0].mxu0
    %v433 = vadd.f32 %v291, %v432
    %v434 = vpop.f32.mrb[0].mxu0
    %435 = vdwg.mxu0
    %v436 = vld [vmem:[#allocation3] sm:$0xff]
    %v437 = vld [vmem:[#allocation3 + $0x8] sm:$0xff]
    %v438 = vld [vmem:[#allocation3 + $0x10] sm:$0xff]
    %v439 = vadd.f32 %v436, %v362
    %v440 = vxor.u32 %v439, 2147483648
    %v441 = vmul.f32 %v440, 1.442695
    %v442 = vpow.pop %v441
    %v443 = vadd.f32 %v442, 1.0
    %v444 = vrcp.pop %v443
    %v445 = vmul.f32 1.0, %v444
    %v446 = vadd.f32 %v437, %v364
    %v447 = vxor.u32 %v446, 2147483648
    %v448 = vmul.f32 %v447, 1.442695
    %v449 = vpow.pop %v448
    %v450 = vadd.f32 %v449, 1.0
    %v451 = vrcp.pop %v450
    %v452 = vmul.f32 1.0, %v451
    %v453 = vmul.f32 %v445, %v433
    %v454 = vadd.f32 %v438, %v453
    %v455 = vtanh.pop %v454
    %v456 = vsub.f32 1.0, %v452
    %v457 = vmul.f32 %v456, %v455
    %v458 = vmul.f32 %v452, %v229
    %v459 = vadd.f32 %v457, %v458
    %460 = vst [vmem:[#allocation2] sm:$0xff] %v459
    %461 = vst [vmem:[%s5] sm:$0xff] %v459
    %v462 = vld [vmem:[#allocation2] sm:$0xff]
    %v463 = vld [vmem:[#allocation4] sm:$0xff]
    %v464 = vld [vmem:[#allocation4 + $0x8] sm:$0xff]
    %v465 = vld [vmem:[#allocation4 + $0x10] sm:$0xff]
    %v466 = vld [vmem:[#allocation4 + $0x18] sm:$0xff]
    %v467 = vld [vmem:[#allocation4 + $0x20] sm:$0xff]
    %v468 = vld [vmem:[#allocation4 + $0x28] sm:$0xff]
    %v469 = vld [vmem:[#allocation4 + $0x30] sm:$0xff]
    %v470 = vld [vmem:[#allocation4 + $0x38] sm:$0xff]
    %v471 = vld [vmem:[#allocation4 + $0x40] sm:$0xff]
    %v472 = vld [vmem:[#allocation4 + $0x48] sm:$0xff]
    %v473 = vld [vmem:[#allocation4 + $0x50] sm:$0xff]
    %v474 = vld [vmem:[#allocation4 + $0x58] sm:$0xff]
    %v475 = vld [vmem:[#allocation4 + $0x60] sm:$0xff]
    %v476 = vld [vmem:[#allocation4 + $0x68] sm:$0xff]
    %v477 = vld [vmem:[#allocation4 + $0x70] sm:$0xff]
    %v478 = vld [vmem:[#allocation4 + $0x78] sm:$0xff]
    %v479 = vld [vmem:[#allocation4 + $0x80] sm:$0xff]
    %v480 = vld [vmem:[#allocation4 + $0x88] sm:$0xff]
    %v481 = vld [vmem:[#allocation4 + $0x90] sm:$0xff]
    %v482 = vld [vmem:[#allocation4 + $0x98] sm:$0xff]
    %v483 = vld [vmem:[#allocation4 + $0xa0] sm:$0xff]
    %v484 = vld [vmem:[#allocation4 + $0xa8] sm:$0xff]
    %v485 = vld [vmem:[#allocation4 + $0xb0] sm:$0xff]
    %v486 = vld [vmem:[#allocation4 + $0xb8] sm:$0xff]
    %v487 = vld [vmem:[#allocation4 + $0xc0] sm:$0xff]
    %v488 = vld [vmem:[#allocation4 + $0xc8] sm:$0xff]
    %v489 = vld [vmem:[#allocation4 + $0xd0] sm:$0xff]
    %v490 = vld [vmem:[#allocation4 + $0xd8] sm:$0xff]
    %v491 = vld [vmem:[#allocation4 + $0xe0] sm:$0xff]
    %v492 = vld [vmem:[#allocation4 + $0xe8] sm:$0xff]
    %v493 = vld [vmem:[#allocation4 + $0xf0] sm:$0xff]
    %v494 = vld [vmem:[#allocation4 + $0xf8] sm:$0xff]
    %v495 = vld [vmem:[#allocation4 + $0x100] sm:$0xff]
    %v496 = vld [vmem:[#allocation4 + $0x108] sm:$0xff]
    %v497 = vld [vmem:[#allocation4 + $0x110] sm:$0xff]
    %v498 = vld [vmem:[#allocation4 + $0x118] sm:$0xff]
    %v499 = vld [vmem:[#allocation4 + $0x120] sm:$0xff]
    %v500 = vld [vmem:[#allocation4 + $0x128] sm:$0xff]
    %v501 = vld [vmem:[#allocation4 + $0x130] sm:$0xff]
    %v502 = vld [vmem:[#allocation4 + $0x138] sm:$0xff]
    %v503 = vld [vmem:[#allocation4 + $0x140] sm:$0xff]
    %v504 = vld [vmem:[#allocation4 + $0x148] sm:$0xff]
    %v505 = vld [vmem:[#allocation4 + $0x150] sm:$0xff]
    %v506 = vld [vmem:[#allocation4 + $0x158] sm:$0xff]
    %v507 = vld [vmem:[#allocation4 + $0x160] sm:$0xff]
    %v508 = vld [vmem:[#allocation4 + $0x168] sm:$0xff]
    %v509 = vld [vmem:[#allocation4 + $0x170] sm:$0xff]
    %v510 = vld [vmem:[#allocation4 + $0x178] sm:$0xff]
    %v511 = vld [vmem:[%s4] sm:$0x7]
    %v513 = vlaneseq
    %v514 = vshrl.u32 %v513, 7
    %v515 = vsub.s32 0, %v514
    %v516 = vrot.slane %v511, %v515
    %v517 = vlaneseq
    %v518 = vshrl.u32 %v517, 7
    %v519 = vsub.s32 1, %v518
    %v520 = vrot.slane %v511, %v519
    %v521 = vlaneseq
    %v522 = vshrl.u32 %v521, 7
    %v523 = vsub.s32 2, %v522
    %v524 = vrot.slane %v511, %v523
    %528 = vmatprep.subr.mxu0 %v464
    %529 = vmatpush1.msra.mxu0 %v463
    %530 = vmatprep.subr.mxu0 %v467
    %531 = vmatpush1.msra.mxu0 %v466
    %532 = vmatprep.subr.mxu0 %v470
    %533 = vmatpush1.msra.mxu0 %v469
    %534 = vmatprep.subr.mxu0 %v473
    %535 = vmatpush1.msra.mxu0 %v472
    %536 = vmatprep.subr.mxu0 %v476
    %537 = vmatpush1.msra.mxu0 %v475
    %538 = vmatprep.subr.mxu0 %v479
    %539 = vmatpush1.msra.mxu0 %v478
    %540 = vmatprep.subr.mxu0 %v482
    %541 = vmatpush1.msra.mxu0 %v481
    %542 = vmatprep.subr.mxu0 %v485
    %543 = vmatpush1.msra.mxu0 %v484
    %544 = vmatprep.subr.mxu0 %v488
    %545 = vmatpush1.msra.mxu0 %v487
    %546 = vmatprep.subr.mxu0 %v491
    %547 = vmatpush1.msra.mxu0 %v490
    %548 = vmatprep.subr.mxu0 %v494
    %549 = vmatpush1.msra.mxu0 %v493
    %550 = vmatprep.subr.mxu0 %v497
    %551 = vmatpush1.msra.mxu0 %v496
    %552 = vmatprep.subr.mxu0 %v500
    %553 = vmatpush1.msra.mxu0 %v499
    %554 = vmatprep.subr.mxu0 %v503
    %555 = vmatpush1.msra.mxu0 %v502
    %556 = vmatprep.subr.mxu0 %v506
    %557 = vmatpush1.msra.mxu0 %v505
    %558 = vmatprep.subr.mxu0 %v509
    %559 = vmatpush1.msra.mxu0 %v508
    %560 = vmatprep.subr.mxu0 0.0
    %561 = vmatpush1.msra.mxu0 0.0
    %562 = vmatprep.subr.mxu0 0.0
    %563 = vmatpush1.msra.mxu0 0.0
    %564 = vmatprep.subr.mxu0 0.0
    %565 = vmatpush1.msra.mxu0 0.0
    %566 = vmatprep.subr.mxu0 0.0
    %567 = vmatpush1.msra.mxu0 0.0
    %568 = vmatprep.subr.mxu0 0.0
    %569 = vmatpush1.msra.mxu0 0.0
    %570 = vmatprep.subr.mxu0 0.0
    %571 = vmatpush1.msra.mxu0 0.0
    %572 = vmatprep.subr.mxu0 0.0
    %573 = vmatpush1.msra.mxu0 0.0
    %574 = vmatprep.subr.mxu0 0.0
    %575 = vmatpush1.msra.mxu0 0.0
    %576 = vmatprep.subr.mxu0 0.0
    %577 = vmatpush1.msra.mxu0 0.0
    %578 = vmatprep.subr.mxu0 0.0
    %579 = vmatpush1.msra.mxu0 0.0
    %580 = vmatprep.subr.mxu0 0.0
    %581 = vmatpush1.msra.mxu0 0.0
    %582 = vmatprep.subr.mxu0 0.0
    %583 = vmatpush1.msra.mxu0 0.0
    %584 = vmatprep.subr.mxu0 0.0
    %585 = vmatpush1.msra.mxu0 0.0
    %586 = vmatprep.subr.mxu0 0.0
    %587 = vmatpush1.msra.mxu0 0.0
    %588 = vmatprep.subr.mxu0 0.0
    %589 = vmatpush1.msra.mxu0 0.0
    %590 = vmatprep.subr.mxu0 0.0
    %591 = vmatpush1.msra.mxu0 0.0
    %592 = vmatprep.mubr.f32.mxu0 0.0
    %593 = vmatmul.mubr.f32.gmra.mrb[0].mxu0 %v462
    %v594 = vpop.f32.mrb[0].mxu0
    %v595 = vadd.f32 %v516, %v594
    %v596 = vpop.f32.mrb[0].mxu0
    %v597 = vadd.f32 %v520, %v596
    %598 = vdwg.mxu0
    %599 = vmatprep.subr.mxu0 0.0
    %600 = vmatpush1.msra.mxu0 %v465
    %601 = vmatprep.subr.mxu0 0.0
    %602 = vmatpush1.msra.mxu0 %v468
    %603 = vmatprep.subr.mxu0 0.0
    %604 = vmatpush1.msra.mxu0 %v471
    %605 = vmatprep.subr.mxu0 0.0
    %606 = vmatpush1.msra.mxu0 %v474
    %607 = vmatprep.subr.mxu0 0.0
    %608 = vmatpush1.msra.mxu0 %v477
    %609 = vmatprep.subr.mxu0 0.0
    %610 = vmatpush1.msra.mxu0 %v480
    %611 = vmatprep.subr.mxu0 0.0
    %612 = vmatpush1.msra.mxu0 %v483
    %613 = vmatprep.subr.mxu0 0.0
    %614 = vmatpush1.msra.mxu0 %v486
    %615 = vmatprep.subr.mxu0 0.0
    %616 = vmatpush1.msra.mxu0 %v489
    %617 = vmatprep.subr.mxu0 0.0
    %618 = vmatpush1.msra.mxu0 %v492
    %619 = vmatprep.subr.mxu0 0.0
    %620 = vmatpush1.msra.mxu0 %v495
    %621 = vmatprep.subr.mxu0 0.0
    %622 = vmatpush1.msra.mxu0 %v498
    %623 = vmatprep.subr.mxu0 0.0
    %624 = vmatpush1.msra.mxu0 %v501
    %625 = vmatprep.subr.mxu0 0.0
    %626 = vmatpush1.msra.mxu0 %v504
    %627 = vmatprep.subr.mxu0 0.0
    %628 = vmatpush1.msra.mxu0 %v507
    %629 = vmatprep.subr.mxu0 0.0
    %630 = vmatpush1.msra.mxu0 %v510
    %631 = vmatprep.subr.mxu0 0.0
    %632 = vmatpush1.msra.mxu0 0.0
    %633 = vmatprep.subr.mxu0 0.0
    %634 = vmatpush1.msra.mxu0 0.0
    %635 = vmatprep.subr.mxu0 0.0
    %636 = vmatpush1.msra.mxu0 0.0
    %637 = vmatprep.subr.mxu0 0.0
    %638 = vmatpush1.msra.mxu0 0.0
    %639 = vmatprep.subr.mxu0 0.0
    %640 = vmatpush1.msra.mxu0 0.0
    %641 = vmatprep.subr.mxu0 0.0
    %642 = vmatpush1.msra.mxu0 0.0
    %643 = vmatprep.subr.mxu0 0.0
    %644 = vmatpush1.msra.mxu0 0.0
    %645 = vmatprep.subr.mxu0 0.0
    %646 = vmatpush1.msra.mxu0 0.0
    %647 = vmatprep.subr.mxu0 0.0
    %648 = vmatpush1.msra.mxu0 0.0
    %649 = vmatprep.subr.mxu0 0.0
    %650 = vmatpush1.msra.mxu0 0.0
    %651 = vmatprep.subr.mxu0 0.0
    %652 = vmatpush1.msra.mxu0 0.0
    %653 = vmatprep.subr.mxu0 0.0
    %654 = vmatpush1.msra.mxu0 0.0
    %655 = vmatprep.subr.mxu0 0.0
    %656 = vmatpush1.msra.mxu0 0.0
    %657 = vmatprep.subr.mxu0 0.0
    %658 = vmatpush1.msra.mxu0 0.0
    %659 = vmatprep.subr.mxu0 0.0
    %660 = vmatpush1.msra.mxu0 0.0
    %661 = vmatprep.subr.mxu0 0.0
    %662 = vmatpush1.msra.mxu0 0.0
    %663 = vmatprep.mubr.f32.mxu0 0.0
    %664 = vmatmul.mubr.f32.gmra.mrb[0].mxu0 %v462
    %v665 = vpop.f32.mrb[0].mxu0
    %v666 = vadd.f32 %v524, %v665
    %v667 = vpop.f32.mrb[0].mxu0
    %668 = vdwg.mxu0
    %s669 = scalar_lea.vmem [#allocation3], 24
    %v670 = vld [vmem:[%s669] sm:$0xff]
    %v671 = vld [vmem:[%s669 + $0x8] sm:$0xff]
    %v672 = vld [vmem:[%s669 + $0x10] sm:$0xff]
    %v673 = vadd.f32 %v670, %v595
    %v674 = vxor.u32 %v673, 2147483648
    %v675 = vmul.f32 %v674, 1.442695
    %v676 = vpow.pop %v675
    %v677 = vadd.f32 %v676, 1.0
    %v678 = vrcp.pop %v677
    %v679 = vmul.f32 1.0, %v678
    %v680 = vadd.f32 %v671, %v597
    %v681 = vxor.u32 %v680, 2147483648
    %v682 = vmul.f32 %v681, 1.442695
    %v683 = vpow.pop %v682
    %v684 = vadd.f32 %v683, 1.0
    %v685 = vrcp.pop %v684
    %v686 = vmul.f32 1.0, %v685
    %v687 = vmul.f32 %v679, %v666
    %v688 = vadd.f32 %v672, %v687
    %v689 = vtanh.pop %v688
    %v690 = vsub.f32 1.0, %v686
    %v691 = vmul.f32 %v690, %v689
    %v692 = vmul.f32 %v686, %v462
    %v693 = vadd.f32 %v691, %v692
    %694 = vst [vmem:[#allocation2] sm:$0xff] %v693
    %s695 = scalar_lea.vmem %s5, 8
    %696 = vst [vmem:[%s695] sm:$0xff] %v693
    // Predicated region
    $region30: #{_lambda_.3} parent=1 // pred_check
      _
    $region31: #{_lambda_.3} parent=1 // pred_check_branch
      %698 = sbr.rel (0) target = $region33
    $region32: #{_lambda_.3} parent=1 // pred_region
      _
    $region33: #{_lambda_.3} parent=1 // pred_fallthru
      _
    // Predicated region
    $region34: #{_lambda_.3} parent=1 // pred_check
      _
    $region35: #{_lambda_.3} parent=1 // pred_check_branch
      %700 = sbr.rel (0) target = $region37
    $region36: #{_lambda_.3} parent=1 // pred_region
      _
    $region37: #{_lambda_.3} parent=1 // pred_fallthru
      _
    %701 = vsyncpa [#allocation5], 1

// kernel: _lambda_.4
$region0: #{_lambda_.4}
  #allocation0 [shape = 'u32[]', space=smem, size = 0x4, offset = 0x4, fixed_abs, tag = 'smem constant byte address 0x4 - core index']
  #allocation1 [shape = 'u32[144,128]{1,0:T(1,128)}', space=vmem, size = 0x12000, scoped, tag = 'internal scratch']
  #allocation2 [shape = 'f32[8,128]{1,0:T(8,128)}', space=vmem, size = 0x1000, scoped, tag = 'scratch operand']
  #allocation3 [shape = 'f32[2,8,384]{2,1,0:T(8,128)}', space=vmem, size = 0x6000, scoped, tag = 'scratch operand']
  %s0 = inlined_call_operand.vmem [shape: f32[2,8,128], index: 0, kind: input, shape index: {}]
  %s1 = inlined_call_operand.hbm [shape: f32[128,384], index: 1, kind: input, shape index: {}]
  %s2 = inlined_call_operand.vmem [shape: f32[1,384], index: 2, kind: input, shape index: {}]
  %s3 = inlined_call_operand.vmem [shape: f32[128,384], index: 3, kind: input, shape index: {}]
  %s4 = inlined_call_operand.vmem [shape: f32[1,384], index: 4, kind: input, shape index: {}]
  %s5 = inlined_call_operand.vmem [shape: f32[2,8,128], index: 5, kind: output, shape index: {}]
  %s6 = sld [smem:[#allocation0]]
  $region38: #{_lambda_.4} parent=0
    _
  %s8 = ssub.s32 1, %s6
  %s9 = scalar_select 0, %s8, %s6
  $region1: #{_lambda_.4} parent=0
    #allocation4 [shape = 'u8[196608]{0}', space=vmem, size = 0x30000, scoped, tag = 'input window, operand 1, single buffered']
    #allocation5 [shape = 's32[1]{0}', space=sflag, size = 0x4, scoped, tag = 'scoped memory for _lambda_.4']
    %10 = vsyncpa [#allocation5], 0
    // Predicated region
    $region2: #{_lambda_.4} parent=1 // pred_check
      _
    $region3: #{_lambda_.4} parent=1 // pred_check_branch
      %12 = sbr.rel (0) target = $region5
    $region4: #{_lambda_.4} parent=1 // pred_region
      _
    $region5: #{_lambda_.4} parent=1 // pred_fallthru
      _
    // Predicated region
    $region6: #{_lambda_.4} parent=1 // pred_check
      _
    $region7: #{_lambda_.4} parent=1 // pred_check_branch
      %14 = sbr.rel (0) target = $region9
    $region8: #{_lambda_.4} parent=1 // pred_region
      %s16 = ssub.s32 6144, 6144
      %17 = vsyncadd [#allocation5], %s16
      %s18 = sshll.u32 [#allocation4], 4
      %s19 = int_to_ptr.vmem [resolvable:$true] %s18
      %24 = dma.hbm_to_vmem [thread:$0]  %s1, 6144, %s19, [#allocation5], 384, 384, 24
    $region9: #{_lambda_.4} parent=1 // pred_fallthru
      _
    // Predicated region
    $region10: #{_lambda_.4} parent=1 // pred_check
      _
    $region11: #{_lambda_.4} parent=1 // pred_check_branch
      %26 = sbr.rel (0) target = $region13
    $region12: #{_lambda_.4} parent=1 // pred_region
      _
    $region13: #{_lambda_.4} parent=1 // pred_fallthru
      _
    // Predicated region
    $region14: #{_lambda_.4} parent=1 // pred_check
      _
    $region15: #{_lambda_.4} parent=1 // pred_check_branch
      %28 = sbr.rel (0) target = $region17
    $region16: #{_lambda_.4} parent=1 // pred_region
      _
    $region17: #{_lambda_.4} parent=1 // pred_fallthru
      _
    // Predicated region
    $region18: #{_lambda_.4} parent=1 // pred_check
      _
    $region19: #{_lambda_.4} parent=1 // pred_check_branch
      %30 = sbr.rel (0) target = $region21
    $region20: #{_lambda_.4} parent=1 // pred_region
      _
    $region21: #{_lambda_.4} parent=1 // pred_fallthru
      _
    // Predicated region
    $region22: #{_lambda_.4} parent=1 // pred_check
      _
    $region23: #{_lambda_.4} parent=1 // pred_check_branch
      %32 = sbr.rel (0) target = $region25
    $region24: #{_lambda_.4} parent=1 // pred_region
      %33 = dma.done [#allocation5], 6144
    $region25: #{_lambda_.4} parent=1 // pred_fallthru
      _
    %p34 = scmp.eq.s32.totalorder 0, 0
    // Predicated region
    $region26: #{_lambda_.4} parent=1 // pred_check
      %p35 = pneg %p34
    $region27: #{_lambda_.4} parent=1 // pred_check_branch
      %37 = sbr.rel (%p35) target = $region29
    $region28: #{_lambda_.4} parent=1 // pred_region
      %38 = vst [vmem:[#allocation2] sm:$0xff] 0.0
    $region29: #{_lambda_.4} parent=1 // pred_fallthru
      _
    %v39 = vld [vmem:[%s0] sm:$0xff]
    %v40 = vld [vmem:[%s0 + $0x8] sm:$0xff]
    %v41 = vld [vmem:[#allocation4] sm:$0xff]
    %v42 = vld [vmem:[#allocation4 + $0x8] sm:$0xff]
    %v43 = vld [vmem:[#allocation4 + $0x10] sm:$0xff]
    %v44 = vld [vmem:[#allocation4 + $0x18] sm:$0xff]
    %v45 = vld [vmem:[#allocation4 + $0x20] sm:$0xff]
    %v46 = vld [vmem:[#allocation4 + $0x28] sm:$0xff]
    %v47 = vld [vmem:[#allocation4 + $0x30] sm:$0xff]
    %v48 = vld [vmem:[#allocation4 + $0x38] sm:$0xff]
    %v49 = vld [vmem:[#allocation4 + $0x40] sm:$0xff]
    %v50 = vld [vmem:[#allocation4 + $0x48] sm:$0xff]
    %v51 = vld [vmem:[#allocation4 + $0x50] sm:$0xff]
    %v52 = vld [vmem:[#allocation4 + $0x58] sm:$0xff]
    %v53 = vld [vmem:[#allocation4 + $0x60] sm:$0xff]
    %v54 = vld [vmem:[#allocation4 + $0x68] sm:$0xff]
    %v55 = vld [vmem:[#allocation4 + $0x70] sm:$0xff]
    %v56 = vld [vmem:[#allocation4 + $0x78] sm:$0xff]
    %v57 = vld [vmem:[#allocation4 + $0x80] sm:$0xff]
    %v58 = vld [vmem:[#allocation4 + $0x88] sm:$0xff]
    %v59 = vld [vmem:[#allocation4 + $0x90] sm:$0xff]
    %v60 = vld [vmem:[#allocation4 + $0x98] sm:$0xff]
    %v61 = vld [vmem:[#allocation4 + $0xa0] sm:$0xff]
    %v62 = vld [vmem:[#allocation4 + $0xa8] sm:$0xff]
    %v63 = vld [vmem:[#allocation4 + $0xb0] sm:$0xff]
    %v64 = vld [vmem:[#allocation4 + $0xb8] sm:$0xff]
    %v65 = vld [vmem:[#allocation4 + $0xc0] sm:$0xff]
    %v66 = vld [vmem:[#allocation4 + $0xc8] sm:$0xff]
    %v67 = vld [vmem:[#allocation4 + $0xd0] sm:$0xff]
    %v68 = vld [vmem:[#allocation4 + $0xd8] sm:$0xff]
    %v69 = vld [vmem:[#allocation4 + $0xe0] sm:$0xff]
    %v70 = vld [vmem:[#allocation4 + $0xe8] sm:$0xff]
    %v71 = vld [vmem:[#allocation4 + $0xf0] sm:$0xff]
    %v72 = vld [vmem:[#allocation4 + $0xf8] sm:$0xff]
    %v73 = vld [vmem:[#allocation4 + $0x100] sm:$0xff]
    %v74 = vld [vmem:[#allocation4 + $0x108] sm:$0xff]
    %v75 = vld [vmem:[#allocation4 + $0x110] sm:$0xff]
    %v76 = vld [vmem:[#allocation4 + $0x118] sm:$0xff]
    %v77 = vld [vmem:[#allocation4 + $0x120] sm:$0xff]
    %v78 = vld [vmem:[#allocation4 + $0x128] sm:$0xff]
    %v79 = vld [vmem:[#allocation4 + $0x130] sm:$0xff]
    %v80 = vld [vmem:[#allocation4 + $0x138] sm:$0xff]
    %v81 = vld [vmem:[#allocation4 + $0x140] sm:$0xff]
    %v82 = vld [vmem:[#allocation4 + $0x148] sm:$0xff]
    %v83 = vld [vmem:[#allocation4 + $0x150] sm:$0xff]
    %v84 = vld [vmem:[#allocation4 + $0x158] sm:$0xff]
    %v85 = vld [vmem:[#allocation4 + $0x160] sm:$0xff]
    %v86 = vld [vmem:[#allocation4 + $0x168] sm:$0xff]
    %v87 = vld [vmem:[#allocation4 + $0x170] sm:$0xff]
    %v88 = vld [vmem:[#allocation4 + $0x178] sm:$0xff]
    %v89 = vld [vmem:[%s2] sm:$0x7]
    %v91 = vlaneseq
    %v92 = vshrl.u32 %v91, 7
    %v93 = vsub.s32 0, %v92
    %v94 = vrot.slane %v89, %v93
    %v95 = vlaneseq
    %v96 = vshrl.u32 %v95, 7
    %v97 = vsub.s32 1, %v96
    %v98 = vrot.slane %v89, %v97
    %v99 = vlaneseq
    %v100 = vshrl.u32 %v99, 7
    %v101 = vsub.s32 2, %v100
    %v102 = vrot.slane %v89, %v101
    %106 = vmatprep.subr.mxu0 %v42
    %107 = vmatpush1.msra.mxu0 %v41
    %108 = vmatprep.subr.mxu0 %v45
    %109 = vmatpush1.msra.mxu0 %v44
    %110 = vmatprep.subr.mxu0 %v48
    %111 = vmatpush1.msra.mxu0 %v47
    %112 = vmatprep.subr.mxu0 %v51
    %113 = vmatpush1.msra.mxu0 %v50
    %114 = vmatprep.subr.mxu0 %v54
    %115 = vmatpush1.msra.mxu0 %v53
    %116 = vmatprep.subr.mxu0 %v57
    %117 = vmatpush1.msra.mxu0 %v56
    %118 = vmatprep.subr.mxu0 %v60
    %119 = vmatpush1.msra.mxu0 %v59
    %120 = vmatprep.subr.mxu0 %v63
    %121 = vmatpush1.msra.mxu0 %v62
    %122 = vmatprep.subr.mxu0 %v66
    %123 = vmatpush1.msra.mxu0 %v65
    %124 = vmatprep.subr.mxu0 %v69
    %125 = vmatpush1.msra.mxu0 %v68
    %126 = vmatprep.subr.mxu0 %v72
    %127 = vmatpush1.msra.mxu0 %v71
    %128 = vmatprep.subr.mxu0 %v75
    %129 = vmatpush1.msra.mxu0 %v74
    %130 = vmatprep.subr.mxu0 %v78
    %131 = vmatpush1.msra.mxu0 %v77
    %132 = vmatprep.subr.mxu0 %v81
    %133 = vmatpush1.msra.mxu0 %v80
    %134 = vmatprep.subr.mxu0 %v84
    %135 = vmatpush1.msra.mxu0 %v83
    %136 = vmatprep.subr.mxu0 %v87
    %137 = vmatpush1.msra.mxu0 %v86
    %138 = vmatprep.subr.mxu0 0.0
    %139 = vmatpush1.msra.mxu0 0.0
    %140 = vmatprep.subr.mxu0 0.0
    %141 = vmatpush1.msra.mxu0 0.0
    %142 = vmatprep.subr.mxu0 0.0
    %143 = vmatpush1.msra.mxu0 0.0
    %144 = vmatprep.subr.mxu0 0.0
    %145 = vmatpush1.msra.mxu0 0.0
    %146 = vmatprep.subr.mxu0 0.0
    %147 = vmatpush1.msra.mxu0 0.0
    %148 = vmatprep.subr.mxu0 0.0
    %149 = vmatpush1.msra.mxu0 0.0
    %150 = vmatprep.subr.mxu0 0.0
    %151 = vmatpush1.msra.mxu0 0.0
    %152 = vmatprep.subr.mxu0 0.0
    %153 = vmatpush1.msra.mxu0 0.0
    %154 = vmatprep.subr.mxu0 0.0
    %155 = vmatpush1.msra.mxu0 0.0
    %156 = vmatprep.subr.mxu0 0.0
    %157 = vmatpush1.msra.mxu0 0.0
    %158 = vmatprep.subr.mxu0 0.0
    %159 = vmatpush1.msra.mxu0 0.0
    %160 = vmatprep.subr.mxu0 0.0
    %161 = vmatpush1.msra.mxu0 0.0
    %162 = vmatprep.subr.mxu0 0.0
    %163 = vmatpush1.msra.mxu0 0.0
    %164 = vmatprep.subr.mxu0 0.0
    %165 = vmatpush1.msra.mxu0 0.0
    %166 = vmatprep.subr.mxu0 0.0
    %167 = vmatpush1.msra.mxu0 0.0
    %168 = vmatprep.subr.mxu0 0.0
    %169 = vmatpush1.msra.mxu0 0.0
    %170 = vmatprep.mubr.f32.mxu0 0.0
    %171 = vmatmul.mubr.f32.gmra.mrb[0].mxu0 %v39
    %v172 = vpop.f32.mrb[0].mxu0
    %v173 = vadd.f32 %v94, %v172
    %v174 = vpop.f32.mrb[0].mxu0
    %v175 = vadd.f32 %v98, %v174
    %176 = vmatprep.mubr.f32.mxu0 0.0
    %177 = vmatmul.mubr.f32.gmra.mrb[0].mxu0 %v40
    %v178 = vpop.f32.mrb[0].mxu0
    %v179 = vadd.f32 %v94, %v178
    %v180 = vpop.f32.mrb[0].mxu0
    %v181 = vadd.f32 %v98, %v180
    %182 = vdwg.mxu0
    %183 = vmatprep.subr.mxu0 0.0
    %184 = vmatpush1.msra.mxu0 %v43
    %185 = vmatprep.subr.mxu0 0.0
    %186 = vmatpush1.msra.mxu0 %v46
    %187 = vmatprep.subr.mxu0 0.0
    %188 = vmatpush1.msra.mxu0 %v49
    %189 = vmatprep.subr.mxu0 0.0
    %190 = vmatpush1.msra.mxu0 %v52
    %191 = vmatprep.subr.mxu0 0.0
    %192 = vmatpush1.msra.mxu0 %v55
    %193 = vmatprep.subr.mxu0 0.0
    %194 = vmatpush1.msra.mxu0 %v58
    %195 = vmatprep.subr.mxu0 0.0
    %196 = vmatpush1.msra.mxu0 %v61
    %197 = vmatprep.subr.mxu0 0.0
    %198 = vmatpush1.msra.mxu0 %v64
    %199 = vmatprep.subr.mxu0 0.0
    %200 = vmatpush1.msra.mxu0 %v67
    %201 = vmatprep.subr.mxu0 0.0
    %202 = vmatpush1.msra.mxu0 %v70
    %203 = vmatprep.subr.mxu0 0.0
    %204 = vmatpush1.msra.mxu0 %v73
    %205 = vmatprep.subr.mxu0 0.0
    %206 = vmatpush1.msra.mxu0 %v76
    %207 = vmatprep.subr.mxu0 0.0
    %208 = vmatpush1.msra.mxu0 %v79
    %209 = vmatprep.subr.mxu0 0.0
    %210 = vmatpush1.msra.mxu0 %v82
    %211 = vmatprep.subr.mxu0 0.0
    %212 = vmatpush1.msra.mxu0 %v85
    %213 = vmatprep.subr.mxu0 0.0
    %214 = vmatpush1.msra.mxu0 %v88
    %215 = vmatprep.subr.mxu0 0.0
    %216 = vmatpush1.msra.mxu0 0.0
    %217 = vmatprep.subr.mxu0 0.0
    %218 = vmatpush1.msra.mxu0 0.0
    %219 = vmatprep.subr.mxu0 0.0
    %220 = vmatpush1.msra.mxu0 0.0
    %221 = vmatprep.subr.mxu0 0.0
    %222 = vmatpush1.msra.mxu0 0.0
    %223 = vmatprep.subr.mxu0 0.0
    %224 = vmatpush1.msra.mxu0 0.0
    %225 = vmatprep.subr.mxu0 0.0
    %226 = vmatpush1.msra.mxu0 0.0
    %227 = vmatprep.subr.mxu0 0.0
    %228 = vmatpush1.msra.mxu0 0.0
    %229 = vmatprep.subr.mxu0 0.0
    %230 = vmatpush1.msra.mxu0 0.0
    %231 = vmatprep.subr.mxu0 0.0
    %232 = vmatpush1.msra.mxu0 0.0
    %233 = vmatprep.subr.mxu0 0.0
    %234 = vmatpush1.msra.mxu0 0.0
    %235 = vmatprep.subr.mxu0 0.0
    %236 = vmatpush1.msra.mxu0 0.0
    %237 = vmatprep.subr.mxu0 0.0
    %238 = vmatpush1.msra.mxu0 0.0
    %239 = vmatprep.subr.mxu0 0.0
    %240 = vmatpush1.msra.mxu0 0.0
    %241 = vmatprep.subr.mxu0 0.0
    %242 = vmatpush1.msra.mxu0 0.0
    %243 = vmatprep.subr.mxu0 0.0
    %244 = vmatpush1.msra.mxu0 0.0
    %245 = vmatprep.subr.mxu0 0.0
    %246 = vmatpush1.msra.mxu0 0.0
    %247 = vmatprep.mubr.f32.mxu0 0.0
    %248 = vmatmul.mubr.f32.gmra.mrb[0].mxu0 %v39
    %v249 = vpop.f32.mrb[0].mxu0
    %v250 = vadd.f32 %v102, %v249
    %v251 = vpop.f32.mrb[0].mxu0
    %252 = vmatprep.mubr.f32.mxu0 0.0
    %253 = vmatmul.mubr.f32.gmra.mrb[0].mxu0 %v40
    %v254 = vpop.f32.mrb[0].mxu0
    %v255 = vadd.f32 %v102, %v254
    %v256 = vpop.f32.mrb[0].mxu0
    %257 = vdwg.mxu0
    %258 = vst [vmem:[#allocation3] sm:$0xff] %v173
    %259 = vst [vmem:[#allocation3 + $0x8] sm:$0xff] %v175
    %260 = vst [vmem:[#allocation3 + $0x10] sm:$0xff] %v250
    %261 = vst [vmem:[#allocation3 + $0x18] sm:$0xff] %v179
    %262 = vst [vmem:[#allocation3 + $0x20] sm:$0xff] %v181
    %263 = vst [vmem:[#allocation3 + $0x28] sm:$0xff] %v255
    %v264 = vld [vmem:[#allocation2] sm:$0xff]
    %v265 = vld [vmem:[%s3] sm:$0xff]
    %v266 = vld [vmem:[%s3 + $0x8] sm:$0xff]
    %v267 = vld [vmem:[%s3 + $0x10] sm:$0xff]
    %v268 = vld [vmem:[%s3 + $0x18] sm:$0xff]
    %v269 = vld [vmem:[%s3 + $0x20] sm:$0xff]
    %v270 = vld [vmem:[%s3 + $0x28] sm:$0xff]
    %v271 = vld [vmem:[%s3 + $0x30] sm:$0xff]
    %v272 = vld [vmem:[%s3 + $0x38] sm:$0xff]
    %v273 = vld [vmem:[%s3 + $0x40] sm:$0xff]
    %v274 = vld [vmem:[%s3 + $0x48] sm:$0xff]
    %v275 = vld [vmem:[%s3 + $0x50] sm:$0xff]
    %v276 = vld [vmem:[%s3 + $0x58] sm:$0xff]
    %v277 = vld [vmem:[%s3 + $0x60] sm:$0xff]
    %v278 = vld [vmem:[%s3 + $0x68] sm:$0xff]
    %v279 = vld [vmem:[%s3 + $0x70] sm:$0xff]
    %v280 = vld [vmem:[%s3 + $0x78] sm:$0xff]
    %v281 = vld [vmem:[%s3 + $0x80] sm:$0xff]
    %v282 = vld [vmem:[%s3 + $0x88] sm:$0xff]
    %v283 = vld [vmem:[%s3 + $0x90] sm:$0xff]
    %v284 = vld [vmem:[%s3 + $0x98] sm:$0xff]
    %v285 = vld [vmem:[%s3 + $0xa0] sm:$0xff]
    %v286 = vld [vmem:[%s3 + $0xa8] sm:$0xff]
    %v287 = vld [vmem:[%s3 + $0xb0] sm:$0xff]
    %v288 = vld [vmem:[%s3 + $0xb8] sm:$0xff]
    %v289 = vld [vmem:[%s3 + $0xc0] sm:$0xff]
    %v290 = vld [vmem:[%s3 + $0xc8] sm:$0xff]
    %v291 = vld [vmem:[%s3 + $0xd0] sm:$0xff]
    %v292 = vld [vmem:[%s3 + $0xd8] sm:$0xff]
    %v293 = vld [vmem:[%s3 + $0xe0] sm:$0xff]
    %v294 = vld [vmem:[%s3 + $0xe8] sm:$0xff]
    %v295 = vld [vmem:[%s3 + $0xf0] sm:$0xff]
    %v296 = vld [vmem:[%s3 + $0xf8] sm:$0xff]
    %v297 = vld [vmem:[%s3 + $0x100] sm:$0xff]
    %v298 = vld [vmem:[%s3 + $0x108] sm:$0xff]
    %v299 = vld [vmem:[%s3 + $0x110] sm:$0xff]
    %v300 = vld [vmem:[%s3 + $0x118] sm:$0xff]
    %v301 = vld [vmem:[%s3 + $0x120] sm:$0xff]
    %v302 = vld [vmem:[%s3 + $0x128] sm:$0xff]
    %v303 = vld [vmem:[%s3 + $0x130] sm:$0xff]
    %v304 = vld [vmem:[%s3 + $0x138] sm:$0xff]
    %v305 = vld [vmem:[%s3 + $0x140] sm:$0xff]
    %v306 = vld [vmem:[%s3 + $0x148] sm:$0xff]
    %v307 = vld [vmem:[%s3 + $0x150] sm:$0xff]
    %v308 = vld [vmem:[%s3 + $0x158] sm:$0xff]
    %v309 = vld [vmem:[%s3 + $0x160] sm:$0xff]
    %v310 = vld [vmem:[%s3 + $0x168] sm:$0xff]
    %v311 = vld [vmem:[%s3 + $0x170] sm:$0xff]
    %v312 = vld [vmem:[%s3 + $0x178] sm:$0xff]
    %v313 = vld [vmem:[%s4] sm:$0x7]
    %v315 = vlaneseq
    %v316 = vshrl.u32 %v315, 7
    %v317 = vsub.s32 0, %v316
    %v318 = vrot.slane %v313, %v317
    %v319 = vlaneseq
    %v320 = vshrl.u32 %v319, 7
    %v321 = vsub.s32 1, %v320
    %v322 = vrot.slane %v313, %v321
    %v323 = vlaneseq
    %v324 = vshrl.u32 %v323, 7
    %v325 = vsub.s32 2, %v324
    %v326 = vrot.slane %v313, %v325
    %330 = vmatprep.subr.mxu0 %v266
    %331 = vmatpush1.msra.mxu0 %v265
    %332 = vmatprep.subr.mxu0 %v269
    %333 = vmatpush1.msra.mxu0 %v268
    %334 = vmatprep.subr.mxu0 %v272
    %335 = vmatpush1.msra.mxu0 %v271
    %336 = vmatprep.subr.mxu0 %v275
    %337 = vmatpush1.msra.mxu0 %v274
    %338 = vmatprep.subr.mxu0 %v278
    %339 = vmatpush1.msra.mxu0 %v277
    %340 = vmatprep.subr.mxu0 %v281
    %341 = vmatpush1.msra.mxu0 %v280
    %342 = vmatprep.subr.mxu0 %v284
    %343 = vmatpush1.msra.mxu0 %v283
    %344 = vmatprep.subr.mxu0 %v287
    %345 = vmatpush1.msra.mxu0 %v286
    %346 = vmatprep.subr.mxu0 %v290
    %347 = vmatpush1.msra.mxu0 %v289
    %348 = vmatprep.subr.mxu0 %v293
    %349 = vmatpush1.msra.mxu0 %v292
    %350 = vmatprep.subr.mxu0 %v296
    %351 = vmatpush1.msra.mxu0 %v295
    %352 = vmatprep.subr.mxu0 %v299
    %353 = vmatpush1.msra.mxu0 %v298
    %354 = vmatprep.subr.mxu0 %v302
    %355 = vmatpush1.msra.mxu0 %v301
    %356 = vmatprep.subr.mxu0 %v305
    %357 = vmatpush1.msra.mxu0 %v304
    %358 = vmatprep.subr.mxu0 %v308
    %359 = vmatpush1.msra.mxu0 %v307
    %360 = vmatprep.subr.mxu0 %v311
    %361 = vmatpush1.msra.mxu0 %v310
    %362 = vmatprep.subr.mxu0 0.0
    %363 = vmatpush1.msra.mxu0 0.0
    %364 = vmatprep.subr.mxu0 0.0
    %365 = vmatpush1.msra.mxu0 0.0
    %366 = vmatprep.subr.mxu0 0.0
    %367 = vmatpush1.msra.mxu0 0.0
    %368 = vmatprep.subr.mxu0 0.0
    %369 = vmatpush1.msra.mxu0 0.0
    %370 = vmatprep.subr.mxu0 0.0
    %371 = vmatpush1.msra.mxu0 0.0
    %372 = vmatprep.subr.mxu0 0.0
    %373 = vmatpush1.msra.mxu0 0.0
    %374 = vmatprep.subr.mxu0 0.0
    %375 = vmatpush1.msra.mxu0 0.0
    %376 = vmatprep.subr.mxu0 0.0
    %377 = vmatpush1.msra.mxu0 0.0
    %378 = vmatprep.subr.mxu0 0.0
    %379 = vmatpush1.msra.mxu0 0.0
    %380 = vmatprep.subr.mxu0 0.0
    %381 = vmatpush1.msra.mxu0 0.0
    %382 = vmatprep.subr.mxu0 0.0
    %383 = vmatpush1.msra.mxu0 0.0
    %384 = vmatprep.subr.mxu0 0.0
    %385 = vmatpush1.msra.mxu0 0.0
    %386 = vmatprep.subr.mxu0 0.0
    %387 = vmatpush1.msra.mxu0 0.0
    %388 = vmatprep.subr.mxu0 0.0
    %389 = vmatpush1.msra.mxu0 0.0
    %390 = vmatprep.subr.mxu0 0.0
    %391 = vmatpush1.msra.mxu0 0.0
    %392 = vmatprep.subr.mxu0 0.0
    %393 = vmatpush1.msra.mxu0 0.0
    %394 = vmatprep.mubr.f32.mxu0 0.0
    %395 = vmatmul.mubr.f32.gmra.mrb[0].mxu0 %v264
    %v396 = vpop.f32.mrb[0].mxu0
    %v397 = vadd.f32 %v318, %v396
    %v398 = vpop.f32.mrb[0].mxu0
    %v399 = vadd.f32 %v322, %v398
    %400 = vdwg.mxu0
    %401 = vmatprep.subr.mxu0 0.0
    %402 = vmatpush1.msra.mxu0 %v267
    %403 = vmatprep.subr.mxu0 0.0
    %404 = vmatpush1.msra.mxu0 %v270
    %405 = vmatprep.subr.mxu0 0.0
    %406 = vmatpush1.msra.mxu0 %v273
    %407 = vmatprep.subr.mxu0 0.0
    %408 = vmatpush1.msra.mxu0 %v276
    %409 = vmatprep.subr.mxu0 0.0
    %410 = vmatpush1.msra.mxu0 %v279
    %411 = vmatprep.subr.mxu0 0.0
    %412 = vmatpush1.msra.mxu0 %v282
    %413 = vmatprep.subr.mxu0 0.0
    %414 = vmatpush1.msra.mxu0 %v285
    %415 = vmatprep.subr.mxu0 0.0
    %416 = vmatpush1.msra.mxu0 %v288
    %417 = vmatprep.subr.mxu0 0.0
    %418 = vmatpush1.msra.mxu0 %v291
    %419 = vmatprep.subr.mxu0 0.0
    %420 = vmatpush1.msra.mxu0 %v294
    %421 = vmatprep.subr.mxu0 0.0
    %422 = vmatpush1.msra.mxu0 %v297
    %423 = vmatprep.subr.mxu0 0.0
    %424 = vmatpush1.msra.mxu0 %v300
    %425 = vmatprep.subr.mxu0 0.0
    %426 = vmatpush1.msra.mxu0 %v303
    %427 = vmatprep.subr.mxu0 0.0
    %428 = vmatpush1.msra.mxu0 %v306
    %429 = vmatprep.subr.mxu0 0.0
    %430 = vmatpush1.msra.mxu0 %v309
    %431 = vmatprep.subr.mxu0 0.0
    %432 = vmatpush1.msra.mxu0 %v312
    %433 = vmatprep.subr.mxu0 0.0
    %434 = vmatpush1.msra.mxu0 0.0
    %435 = vmatprep.subr.mxu0 0.0
    %436 = vmatpush1.msra.mxu0 0.0
    %437 = vmatprep.subr.mxu0 0.0
    %438 = vmatpush1.msra.mxu0 0.0
    %439 = vmatprep.subr.mxu0 0.0
    %440 = vmatpush1.msra.mxu0 0.0
    %441 = vmatprep.subr.mxu0 0.0
    %442 = vmatpush1.msra.mxu0 0.0
    %443 = vmatprep.subr.mxu0 0.0
    %444 = vmatpush1.msra.mxu0 0.0
    %445 = vmatprep.subr.mxu0 0.0
    %446 = vmatpush1.msra.mxu0 0.0
    %447 = vmatprep.subr.mxu0 0.0
    %448 = vmatpush1.msra.mxu0 0.0
    %449 = vmatprep.subr.mxu0 0.0
    %450 = vmatpush1.msra.mxu0 0.0
    %451 = vmatprep.subr.mxu0 0.0
    %452 = vmatpush1.msra.mxu0 0.0
    %453 = vmatprep.subr.mxu0 0.0
    %454 = vmatpush1.msra.mxu0 0.0
    %455 = vmatprep.subr.mxu0 0.0
    %456 = vmatpush1.msra.mxu0 0.0
    %457 = vmatprep.subr.mxu0 0.0
    %458 = vmatpush1.msra.mxu0 0.0
    %459 = vmatprep.subr.mxu0 0.0
    %460 = vmatpush1.msra.mxu0 0.0
    %461 = vmatprep.subr.mxu0 0.0
    %462 = vmatpush1.msra.mxu0 0.0
    %463 = vmatprep.subr.mxu0 0.0
    %464 = vmatpush1.msra.mxu0 0.0
    %465 = vmatprep.mubr.f32.mxu0 0.0
    %466 = vmatmul.mubr.f32.gmra.mrb[0].mxu0 %v264
    %v467 = vpop.f32.mrb[0].mxu0
    %v468 = vadd.f32 %v326, %v467
    %v469 = vpop.f32.mrb[0].mxu0
    %470 = vdwg.mxu0
    %v471 = vld [vmem:[#allocation3] sm:$0xff]
    %v472 = vld [vmem:[#allocation3 + $0x8] sm:$0xff]
    %v473 = vld [vmem:[#allocation3 + $0x10] sm:$0xff]
    %v474 = vadd.f32 %v471, %v397
    %v475 = vxor.u32 %v474, 2147483648
    %v476 = vmul.f32 %v475, 1.442695
    %v477 = vpow.pop %v476
    %v478 = vadd.f32 %v477, 1.0
    %v479 = vrcp.pop %v478
    %v480 = vmul.f32 1.0, %v479
    %v481 = vadd.f32 %v472, %v399
    %v482 = vxor.u32 %v481, 2147483648
    %v483 = vmul.f32 %v482, 1.442695
    %v484 = vpow.pop %v483
    %v485 = vadd.f32 %v484, 1.0
    %v486 = vrcp.pop %v485
    %v487 = vmul.f32 1.0, %v486
    %v488 = vmul.f32 %v480, %v468
    %v489 = vadd.f32 %v473, %v488
    %v490 = vtanh.pop %v489
    %v491 = vsub.f32 1.0, %v487
    %v492 = vmul.f32 %v491, %v490
    %v493 = vmul.f32 %v487, %v264
    %v494 = vadd.f32 %v492, %v493
    %495 = vst [vmem:[#allocation2] sm:$0xff] %v494
    %496 = vst [vmem:[%s5] sm:$0xff] %v494
    %v497 = vld [vmem:[#allocation2] sm:$0xff]
    %v498 = vld [vmem:[%s3] sm:$0xff]
    %v499 = vld [vmem:[%s3 + $0x8] sm:$0xff]
    %v500 = vld [vmem:[%s3 + $0x10] sm:$0xff]
    %v501 = vld [vmem:[%s3 + $0x18] sm:$0xff]
    %v502 = vld [vmem:[%s3 + $0x20] sm:$0xff]
    %v503 = vld [vmem:[%s3 + $0x28] sm:$0xff]
    %v504 = vld [vmem:[%s3 + $0x30] sm:$0xff]
    %v505 = vld [vmem:[%s3 + $0x38] sm:$0xff]
    %v506 = vld [vmem:[%s3 + $0x40] sm:$0xff]
    %v507 = vld [vmem:[%s3 + $0x48] sm:$0xff]
    %v508 = vld [vmem:[%s3 + $0x50] sm:$0xff]
    %v509 = vld [vmem:[%s3 + $0x58] sm:$0xff]
    %v510 = vld [vmem:[%s3 + $0x60] sm:$0xff]
    %v511 = vld [vmem:[%s3 + $0x68] sm:$0xff]
    %v512 = vld [vmem:[%s3 + $0x70] sm:$0xff]
    %v513 = vld [vmem:[%s3 + $0x78] sm:$0xff]
    %v514 = vld [vmem:[%s3 + $0x80] sm:$0xff]
    %v515 = vld [vmem:[%s3 + $0x88] sm:$0xff]
    %v516 = vld [vmem:[%s3 + $0x90] sm:$0xff]
    %v517 = vld [vmem:[%s3 + $0x98] sm:$0xff]
    %v518 = vld [vmem:[%s3 + $0xa0] sm:$0xff]
    %v519 = vld [vmem:[%s3 + $0xa8] sm:$0xff]
    %v520 = vld [vmem:[%s3 + $0xb0] sm:$0xff]
    %v521 = vld [vmem:[%s3 + $0xb8] sm:$0xff]
    %v522 = vld [vmem:[%s3 + $0xc0] sm:$0xff]
    %v523 = vld [vmem:[%s3 + $0xc8] sm:$0xff]
    %v524 = vld [vmem:[%s3 + $0xd0] sm:$0xff]
    %v525 = vld [vmem:[%s3 + $0xd8] sm:$0xff]
    %v526 = vld [vmem:[%s3 + $0xe0] sm:$0xff]
    %v527 = vld [vmem:[%s3 + $0xe8] sm:$0xff]
    %v528 = vld [vmem:[%s3 + $0xf0] sm:$0xff]
    %v529 = vld [vmem:[%s3 + $0xf8] sm:$0xff]
    %v530 = vld [vmem:[%s3 + $0x100] sm:$0xff]
    %v531 = vld [vmem:[%s3 + $0x108] sm:$0xff]
    %v532 = vld [vmem:[%s3 + $0x110] sm:$0xff]
    %v533 = vld [vmem:[%s3 + $0x118] sm:$0xff]
    %v534 = vld [vmem:[%s3 + $0x120] sm:$0xff]
    %v535 = vld [vmem:[%s3 + $0x128] sm:$0xff]
    %v536 = vld [vmem:[%s3 + $0x130] sm:$0xff]
    %v537 = vld [vmem:[%s3 + $0x138] sm:$0xff]
    %v538 = vld [vmem:[%s3 + $0x140] sm:$0xff]
    %v539 = vld [vmem:[%s3 + $0x148] sm:$0xff]
    %v540 = vld [vmem:[%s3 + $0x150] sm:$0xff]
    %v541 = vld [vmem:[%s3 + $0x158] sm:$0xff]
    %v542 = vld [vmem:[%s3 + $0x160] sm:$0xff]
    %v543 = vld [vmem:[%s3 + $0x168] sm:$0xff]
    %v544 = vld [vmem:[%s3 + $0x170] sm:$0xff]
    %v545 = vld [vmem:[%s3 + $0x178] sm:$0xff]
    %v546 = vld [vmem:[%s4] sm:$0x7]
    %v548 = vlaneseq
    %v549 = vshrl.u32 %v548, 7
    %v550 = vsub.s32 0, %v549
    %v551 = vrot.slane %v546, %v550
    %v552 = vlaneseq
    %v553 = vshrl.u32 %v552, 7
    %v554 = vsub.s32 1, %v553
    %v555 = vrot.slane %v546, %v554
    %v556 = vlaneseq
    %v557 = vshrl.u32 %v556, 7
    %v558 = vsub.s32 2, %v557
    %v559 = vrot.slane %v546, %v558
    %563 = vmatprep.subr.mxu0 %v499
    %564 = vmatpush1.msra.mxu0 %v498
    %565 = vmatprep.subr.mxu0 %v502
    %566 = vmatpush1.msra.mxu0 %v501
    %567 = vmatprep.subr.mxu0 %v505
    %568 = vmatpush1.msra.mxu0 %v504
    %569 = vmatprep.subr.mxu0 %v508
    %570 = vmatpush1.msra.mxu0 %v507
    %571 = vmatprep.subr.mxu0 %v511
    %572 = vmatpush1.msra.mxu0 %v510
    %573 = vmatprep.subr.mxu0 %v514
    %574 = vmatpush1.msra.mxu0 %v513
    %575 = vmatprep.subr.mxu0 %v517
    %576 = vmatpush1.msra.mxu0 %v516
    %577 = vmatprep.subr.mxu0 %v520
    %578 = vmatpush1.msra.mxu0 %v519
    %579 = vmatprep.subr.mxu0 %v523
    %580 = vmatpush1.msra.mxu0 %v522
    %581 = vmatprep.subr.mxu0 %v526
    %582 = vmatpush1.msra.mxu0 %v525
    %583 = vmatprep.subr.mxu0 %v529
    %584 = vmatpush1.msra.mxu0 %v528
    %585 = vmatprep.subr.mxu0 %v532
    %586 = vmatpush1.msra.mxu0 %v531
    %587 = vmatprep.subr.mxu0 %v535
    %588 = vmatpush1.msra.mxu0 %v534
    %589 = vmatprep.subr.mxu0 %v538
    %590 = vmatpush1.msra.mxu0 %v537
    %591 = vmatprep.subr.mxu0 %v541
    %592 = vmatpush1.msra.mxu0 %v540
    %593 = vmatprep.subr.mxu0 %v544
    %594 = vmatpush1.msra.mxu0 %v543
    %595 = vmatprep.subr.mxu0 0.0
    %596 = vmatpush1.msra.mxu0 0.0
    %597 = vmatprep.subr.mxu0 0.0
    %598 = vmatpush1.msra.mxu0 0.0
    %599 = vmatprep.subr.mxu0 0.0
    %600 = vmatpush1.msra.mxu0 0.0
    %601 = vmatprep.subr.mxu0 0.0
    %602 = vmatpush1.msra.mxu0 0.0
    %603 = vmatprep.subr.mxu0 0.0
    %604 = vmatpush1.msra.mxu0 0.0
    %605 = vmatprep.subr.mxu0 0.0
    %606 = vmatpush1.msra.mxu0 0.0
    %607 = vmatprep.subr.mxu0 0.0
    %608 = vmatpush1.msra.mxu0 0.0
    %609 = vmatprep.subr.mxu0 0.0
    %610 = vmatpush1.msra.mxu0 0.0
    %611 = vmatprep.subr.mxu0 0.0
    %612 = vmatpush1.msra.mxu0 0.0
    %613 = vmatprep.subr.mxu0 0.0
    %614 = vmatpush1.msra.mxu0 0.0
    %615 = vmatprep.subr.mxu0 0.0
    %616 = vmatpush1.msra.mxu0 0.0
    %617 = vmatprep.subr.mxu0 0.0
    %618 = vmatpush1.msra.mxu0 0.0
    %619 = vmatprep.subr.mxu0 0.0
    %620 = vmatpush1.msra.mxu0 0.0
    %621 = vmatprep.subr.mxu0 0.0
    %622 = vmatpush1.msra.mxu0 0.0
    %623 = vmatprep.subr.mxu0 0.0
    %624 = vmatpush1.msra.mxu0 0.0
    %625 = vmatprep.subr.mxu0 0.0
    %626 = vmatpush1.msra.mxu0 0.0
    %627 = vmatprep.mubr.f32.mxu0 0.0
    %628 = vmatmul.mubr.f32.gmra.mrb[0].mxu0 %v497
    %v629 = vpop.f32.mrb[0].mxu0
    %v630 = vadd.f32 %v551, %v629
    %v631 = vpop.f32.mrb[0].mxu0
    %v632 = vadd.f32 %v555, %v631
    %633 = vdwg.mxu0
    %634 = vmatprep.subr.mxu0 0.0
    %635 = vmatpush1.msra.mxu0 %v500
    %636 = vmatprep.subr.mxu0 0.0
    %637 = vmatpush1.msra.mxu0 %v503
    %638 = vmatprep.subr.mxu0 0.0
    %639 = vmatpush1.msra.mxu0 %v506
    %640 = vmatprep.subr.mxu0 0.0
    %641 = vmatpush1.msra.mxu0 %v509
    %642 = vmatprep.subr.mxu0 0.0
    %643 = vmatpush1.msra.mxu0 %v512
    %644 = vmatprep.subr.mxu0 0.0
    %645 = vmatpush1.msra.mxu0 %v515
    %646 = vmatprep.subr.mxu0 0.0
    %647 = vmatpush1.msra.mxu0 %v518
    %648 = vmatprep.subr.mxu0 0.0
    %649 = vmatpush1.msra.mxu0 %v521
    %650 = vmatprep.subr.mxu0 0.0
    %651 = vmatpush1.msra.mxu0 %v524
    %652 = vmatprep.subr.mxu0 0.0
    %653 = vmatpush1.msra.mxu0 %v527
    %654 = vmatprep.subr.mxu0 0.0
    %655 = vmatpush1.msra.mxu0 %v530
    %656 = vmatprep.subr.mxu0 0.0
    %657 = vmatpush1.msra.mxu0 %v533
    %658 = vmatprep.subr.mxu0 0.0
    %659 = vmatpush1.msra.mxu0 %v536
    %660 = vmatprep.subr.mxu0 0.0
    %661 = vmatpush1.msra.mxu0 %v539
    %662 = vmatprep.subr.mxu0 0.0
    %663 = vmatpush1.msra.mxu0 %v542
    %664 = vmatprep.subr.mxu0 0.0
    %665 = vmatpush1.msra.mxu0 %v545
    %666 = vmatprep.subr.mxu0 0.0
    %667 = vmatpush1.msra.mxu0 0.0
    %668 = vmatprep.subr.mxu0 0.0
    %669 = vmatpush1.msra.mxu0 0.0
    %670 = vmatprep.subr.mxu0 0.0
    %671 = vmatpush1.msra.mxu0 0.0
    %672 = vmatprep.subr.mxu0 0.0
    %673 = vmatpush1.msra.mxu0 0.0
    %674 = vmatprep.subr.mxu0 0.0
    %675 = vmatpush1.msra.mxu0 0.0
    %676 = vmatprep.subr.mxu0 0.0
    %677 = vmatpush1.msra.mxu0 0.0
    %678 = vmatprep.subr.mxu0 0.0
    %679 = vmatpush1.msra.mxu0 0.0
    %680 = vmatprep.subr.mxu0 0.0
    %681 = vmatpush1.msra.mxu0 0.0
    %682 = vmatprep.subr.mxu0 0.0
    %683 = vmatpush1.msra.mxu0 0.0
    %684 = vmatprep.subr.mxu0 0.0
    %685 = vmatpush1.msra.mxu0 0.0
    %686 = vmatprep.subr.mxu0 0.0
    %687 = vmatpush1.msra.mxu0 0.0
    %688 = vmatprep.subr.mxu0 0.0
    %689 = vmatpush1.msra.mxu0 0.0
    %690 = vmatprep.subr.mxu0 0.0
    %691 = vmatpush1.msra.mxu0 0.0
    %692 = vmatprep.subr.mxu0 0.0
    %693 = vmatpush1.msra.mxu0 0.0
    %694 = vmatprep.subr.mxu0 0.0
    %695 = vmatpush1.msra.mxu0 0.0
    %696 = vmatprep.subr.mxu0 0.0
    %697 = vmatpush1.msra.mxu0 0.0
    %698 = vmatprep.mubr.f32.mxu0 0.0
    %699 = vmatmul.mubr.f32.gmra.mrb[0].mxu0 %v497
    %v700 = vpop.f32.mrb[0].mxu0
    %v701 = vadd.f32 %v559, %v700
    %v702 = vpop.f32.mrb[0].mxu0
    %703 = vdwg.mxu0
    %s704 = scalar_lea.vmem [#allocation3], 24
    %v705 = vld [vmem:[%s704] sm:$0xff]
    %v706 = vld [vmem:[%s704 + $0x8] sm:$0xff]
    %v707 = vld [vmem:[%s704 + $0x10] sm:$0xff]
    %v708 = vadd.f32 %v705, %v630
    %v709 = vxor.u32 %v708, 2147483648
    %v710 = vmul.f32 %v709, 1.442695
    %v711 = vpow.pop %v710
    %v712 = vadd.f32 %v711, 1.0
    %v713 = vrcp.pop %v712
    %v714 = vmul.f32 1.0, %v713
    %v715 = vadd.f32 %v706, %v632
    %v716 = vxor.u32 %v715, 2147483648
    %v717 = vmul.f32 %v716, 1.442695
    %v718 = vpow.pop %v717
    %v719 = vadd.f32 %v718, 1.0
    %v720 = vrcp.pop %v719
    %v721 = vmul.f32 1.0, %v720
    %v722 = vmul.f32 %v714, %v701
    %v723 = vadd.f32 %v707, %v722
    %v724 = vtanh.pop %v723
    %v725 = vsub.f32 1.0, %v721
    %v726 = vmul.f32 %v725, %v724
    %v727 = vmul.f32 %v721, %v497
    %v728 = vadd.f32 %v726, %v727
    %729 = vst [vmem:[#allocation2] sm:$0xff] %v728
    %s730 = scalar_lea.vmem %s5, 8
    %731 = vst [vmem:[%s730] sm:$0xff] %v728
    // Predicated region
    $region30: #{_lambda_.4} parent=1 // pred_check
      _
    $region31: #{_lambda_.4} parent=1 // pred_check_branch
      %733 = sbr.rel (0) target = $region33
    $region32: #{_lambda_.4} parent=1 // pred_region
      _
    $region33: #{_lambda_.4} parent=1 // pred_fallthru
      _
    // Predicated region
    $region34: #{_lambda_.4} parent=1 // pred_check
      _
    $region35: #{_lambda_.4} parent=1 // pred_check_branch
      %735 = sbr.rel (0) target = $region37
    $region36: #{_lambda_.4} parent=1 // pred_region
      _
    $region37: #{_lambda_.4} parent=1 // pred_fallthru
      _
    %736 = vsyncpa [#allocation5], 1

</llo_original>
